<compile_context>
chip_gen: v5e
topology: v5e:2x2
jax: 0.10.0
libtpu: 0.0.40
codegen_flags: <defaults>
</compile_context>

<pallas_src>
import numpy as np
import jax
import jax.numpy as jnp
from jax.experimental import pallas as pl
from jax.experimental.pallas import tpu as pltpu

LANE = 128                      # lanes per vreg
SUBL = 8                        # f32 sublanes per vreg
DET_PER_BLOCK = SUBL * LANE     # 1024 detections per grid step
N_PAD = 2 * DET_PER_BLOCK       # demo size: 2048 detections -> 2 grid steps (v7x)
HROI, WROI = 16, 128            # roi map (rows = y, cols = x), tile friendly
UNDIST_ITERS = 5                # legacy cv2.undistortPoints iteration count
N_PARAMS = 30


def _fast_recip(x):
    """EUP approximate reciprocal + one Newton step (full f32 accuracy)."""
    r = pl.reciprocal(x, approx=True)
    return r * (2.0 - x * r)


def _undistort(u, v, fx, fy, cx, cy, inv_fx, inv_fy, k1, k2, p1, p2, k3):
    """cv2.undistortPoints(..., P=camera_matrix) re-implemented (5 fixed iterations).

    Operates on stacked (rows, 128) tensors; scalar splats used inside the unrolled
    refinement loop are hoisted (JAX does not CSE broadcast_in_dim).
    """
    shp = u.shape
    splat = lambda s: jnp.full(shp, s, jnp.float32)
    k1v, k2v, k3v = splat(k1), splat(k2), splat(k3)
    p1v, p2v = splat(p1), splat(p2)
    two_p1, two_p2 = splat(2.0 * p1), splat(2.0 * p2)

    # multiply by precomputed reciprocals instead of vector division
    x = (u - cx) * inv_fx
    y = (v - cy) * inv_fy
    x0, y0 = x, y
    for _ in range(UNDIST_ITERS):
        r2 = x * x + y * y
        icdist = _fast_recip(1.0 + ((k3v * r2 + k2v) * r2 + k1v) * r2)
        dx = two_p1 * x * y + p2v * (r2 + 2.0 * x * x)
        dy = p1v * (r2 + 2.0 * y * y) + two_p2 * x * y
        x = (x0 - dx) * icdist
        y = (y0 - dy) * icdist
    return x * fx + cx, y * fy + cy


def henet_kernel(params_ref, pred_ref, roi_ref, out_ref):
    # ---- scalar parameters (SMEM reads) ----
    fx_cam, fy_cam = params_ref[0], params_ref[1]
    cx_cam, cy_cam = params_ref[2], params_ref[3]
    k1, k2 = params_ref[4], params_ref[5]
    p1, p2, k3 = params_ref[6], params_ref[7], params_ref[8]
    H10, H11, H12 = params_ref[12], params_ref[13], params_ref[14]
    H20, H21, H22 = params_ref[15], params_ref[16], params_ref[17]
    iP10, iP11, iP12 = params_ref[21], params_ref[22], params_ref[23]
    A0_1 = params_ref[27]
    inv_fx, inv_fy = params_ref[28], params_ref[29]

    # ---- per-detection slabs, each one full (8,128) f32 vreg ----
    x1 = pred_ref[0]
    y1 = pred_ref[1]
    x2 = pred_ref[2]
    y2 = pred_ref[3]
    det_valid = pred_ref[6]

    u_mid = (x1 + x2) * 0.5

    # fused foot/head undistortion on a (16,128) stack (2 full vregs):
    # rows 0..7 = foot ((x1+x2)/2, y2), rows 8..15 = head ((x1+x2)/2, y1).
    # Concats of whole (8,128) vregs are pure register placement (no sublane copies).
    u = jnp.concatenate([u_mid, u_mid], axis=0)
    v = jnp.concatenate([y2, y1], axis=0)
    px, py = _undistort(u, v, fx_cam, fy_cam, cx_cam, cy_cam,
                        inv_fx, inv_fy, k1, k2, p1, p2, k3)

    foot_x = px[:SUBL, :]
    foot_y = py[:SUBL, :]

    # ---- ROI lookup: roi[int(foot_y), int(foot_x)] ----
    # int() truncates toward zero; int32 cast matches for in-range coords.
    # Out-of-bounds (or NaN) foot points are folded into `valid` instead of
    # silently clipping onto the ROI; the clip below only keeps the one-hots
    # well-formed.
    in_bounds = ((foot_x >= 0.0) & (foot_x < float(WROI)) &
                 (foot_y >= 0.0) & (foot_y < float(HROI)))
    ix = jnp.clip(foot_x.astype(jnp.int32), 0, WROI - 1)
    iy = jnp.clip(foot_y.astype(jnp.int32), 0, HROI - 1)

    roi_bf16 = roi_ref[...]                                     # already bf16
    row_iota = jax.lax.broadcasted_iota(jnp.int32, (HROI, LANE), 0)
    col_iota = jax.lax.broadcasted_iota(jnp.int32, (WROI, LANE), 0)

    # MXU gather per sublane row: contract the 128-wide column axis first
    # (roi[16,128] @ colsel[128,128]) -> (16,128), then a cheap 16-row sublane
    # reduction with the f32 row one-hot (keeps the big K on the MXU, not the XLU).
    roi_rows = []
    for s in range(SUBL):
        ix_s = ix[s:s + 1, :]                                   # (1,128)
        iy_s = iy[s:s + 1, :]
        colsel = (col_iota == ix_s).astype(jnp.bfloat16)        # (128,128), no f32 intermediate
        rowsel = (row_iota == iy_s).astype(jnp.float32)         # (16,128)
        roi_cols = jax.lax.dot_general(
            roi_bf16, colsel, (((1,), (0,)), ((), ())),
            preferred_element_type=jnp.float32)                 # (16,128)
        roi_rows.append(jnp.sum(roi_cols * rowsel, axis=0, keepdims=True))
    roi_val = jnp.concatenate(roi_rows, axis=0)                 # (8,128)

    # ---- calc_scale(foot): v = H @ [fx, fy, 1]; v /= v[2]; scale = v[1] + A0[1] ----
    h1 = H10 * foot_x + H11 * foot_y + H12
    h2 = H20 * foot_x + H21 * foot_y + H22
    scale = h1 * _fast_recip(h2) + A0_1

    # ---- cameraToCamera: world_y = scale * (invProj[1] @ [x, y, 1]) ----
    proj = iP10 * px + iP11 * py + iP12                         # (16,128)
    height = scale * (proj[:SUBL, :] - proj[SUBL:, :])
    # round(float(h), 2)  (binary half-to-even; within the 0.02 check tolerance)
    height = jnp.round(height * 100.0) * 0.01

    # roi is a binary (0/1) mask; |roi_val - 1| < 0.5 matches `== 1` while being
    # robust to the MXU accumulation path.
    valid = (jnp.abs(roi_val - 1.0) < 0.5) & (det_valid > 0.5) & in_bounds

    # two full lane-dense (8,128) stores
    out_ref[0] = jnp.where(valid, height, 0.0)
    out_ref[1] = valid.astype(jnp.float32)


def henet_forward(params, pred, roi):
    n_attr, n = pred.shape
    assert n % DET_PER_BLOCK == 0, "detections must be padded to a multiple of 1024"
    n_blocks = n // DET_PER_BLOCK
    n_chunks = n // LANE
    pred_r = pred.reshape(n_attr, n_chunks, LANE)       # free row-major view
    roi_bf16 = roi.astype(jnp.bfloat16)                 # cast once, stays resident

    out = pl.pallas_call(
        henet_kernel,
        out_shape=jax.ShapeDtypeStruct((2, n_chunks, LANE), jnp.float32),
        grid_spec=pltpu.PrefetchScalarGridSpec(
            num_scalar_prefetch=0,
            grid=(n_blocks,),
            in_specs=[
                pl.BlockSpec(memory_space=pltpu.MemorySpace.SMEM),        # params
                pl.BlockSpec((n_attr, SUBL, LANE), lambda b: (0, b, 0)),  # pred block
                pl.BlockSpec((HROI, WROI), lambda b: (0, 0)),             # roi (resident)
            ],
            out_specs=pl.BlockSpec((2, SUBL, LANE), lambda b: (0, b, 0)),
        ),
        compiler_params=pltpu.CompilerParams(
            dimension_semantics=("parallel",)),   # shards blocks across v7x TCs
    )(params, pred_r, roi_bf16)
    return out.reshape(2, n)


# ------------------------ pure-numpy reference (for checking) ------------------------
def _undistort_np(u, v, fx, fy, cx, cy, dist):
    k1, k2, p1, p2, k3 = dist
    x = (u - cx) / fx
    y = (v - cy) / fy
    x0, y0 = x, y
    for _ in range(UNDIST_ITERS):
        r2 = x * x + y * y
        icdist = 1.0 / (1.0 + ((k3 * r2 + k2) * r2 + k1) * r2)
        dx = 2.0 * p1 * x * y + p2 * (r2 + 2.0 * x * x)
        dy = p1 * (r2 + 2.0 * y * y) + 2.0 * p2 * x * y
        x = (x0 - dx) * icdist
        y = (y0 - dy) * icdist
    return x * fx + cx, y * fy + cy


def reference_forward(pred_np, fx, fy, cx, cy, dist, Hm, invProj, A0, roi):
    heights = []
    for i in range(pred_np.shape[1]):
        if pred_np[6, i] <= 0.5:
            heights.append(None)
            continue
        x1, y1, x2, y2 = pred_np[0, i], pred_np[1, i], pred_np[2, i], pred_np[3, i]
        u = (x1 + x2) * 0.5
        fxu, fyu = _undistort_np(u, y2, fx, fy, cx, cy, dist)
        if roi[int(fyu), int(fxu)] == 1:
            hxu, hyu = _undistort_np(u, y1, fx, fy, cx, cy, dist)
            v = Hm @ np.array([fxu, fyu, 1.0])
            scale = v[1] / v[2] + A0[1]
            wf = scale * (invProj[1, 0] * fxu + invProj[1, 1] * fyu + invProj[1, 2])
            wh = scale * (invProj[1, 0] * hxu + invProj[1, 1] * hyu + invProj[1, 2])
            heights.append(round(float(wf - wh), 2))
        else:
            heights.append(None)
    return heights


if __name__ == "__main__":
    key = jax.random.PRNGKey(0)
    n_det = 8

    # deterministic synthetic detections (x1, y1, x2, y2, conf, cls)
    k_a, k_b, k_c, k_d = jax.random.split(key, 4)
    cx_box = jax.random.uniform(k_a, (n_det,), minval=24.0, maxval=104.0)
    half_w = jax.random.uniform(k_b, (n_det,), minval=2.0, maxval=8.0)
    y1_box = jax.random.uniform(k_c, (n_det,), minval=2.0, maxval=6.0)
    y2_box = jax.random.uniform(k_d, (n_det,), minval=9.0, maxval=14.0)

    pred = jnp.zeros((8, N_PAD), jnp.float32)
    pred = pred.at[0, :n_det].set(cx_box - half_w)   # x1
    pred = pred.at[1, :n_det].set(y1_box)            # y1
    pred = pred.at[2, :n_det].set(cx_box + half_w)   # x2
    pred = pred.at[3, :n_det].set(y2_box)            # y2
    pred = pred.at[4, :n_det].set(0.9)               # conf (unused by forward)
    pred = pred.at[5, :n_det].set(0.0)               # cls  (unused by forward)
    pred = pred.at[6, :n_det].set(1.0)               # real-detection flag

    # deterministic camera / geometry parameters (shapes match the module __init__)
    fx_cam, fy_cam, cx_cam, cy_cam = 100.0, 100.0, 64.0, 8.0
    dist_coeffs = [0.01, 0.001, 0.0005, 0.0005, 0.0001]            # k1 k2 p1 p2 k3
    Hm = np.array([[1.0, 0.01, 0.5],
                   [0.02, 1.1, 0.3],
                   [0.0001, 0.0002, 1.0]], dtype=np.float32)       # H (3x3)
    invProj = np.array([[0.01, 0.001, -0.5],
                        [0.002, 0.012, -0.3],
                        [0.0, 0.0, 1.0]], dtype=np.float32)        # invProj_matrix (3x3)
    A0 = np.array([0.0, 0.5, 0.0], dtype=np.float32)

    roi_np = np.zeros((HROI, WROI), dtype=np.float32)
    roi_np[:, 32:96] = 1.0                                         # binary ROI mask

    params = jnp.asarray(
        [fx_cam, fy_cam, cx_cam, cy_cam] + dist_coeffs
        + list(Hm.reshape(-1)) + list(invProj.reshape(-1))
        + [float(A0[1]), 1.0 / fx_cam, 1.0 / fy_cam],
        dtype=jnp.float32)
    assert params.shape == (N_PARAMS,)

    out = jax.block_until_ready(henet_forward(params, pred, jnp.asarray(roi_np)))

    # convert kernel output to the PyTorch-style list (float or None per detection)
    out_np = np.asarray(out)
    kernel_heights = [round(float(out_np[0, i]), 2) if out_np[1, i] > 0.5 else None
                      for i in range(n_det)]

    ref_heights = reference_forward(np.asarray(pred), fx_cam, fy_cam, cx_cam, cy_cam,
                                    dist_coeffs, Hm, invProj, A0, roi_np)[:n_det]

    for kh, rh in zip(kernel_heights, ref_heights):
        if rh is None:
            assert kh is None, f"validity mismatch: kernel={kh}, ref={rh}"
        else:
            assert kh is not None and abs(kh - rh) <= 0.02, f"height mismatch: {kh} vs {rh}"

    print("KERNEL_OK")
</pallas_src>

<mosaic_0001>
module attributes {stable_mosaic.version = 11 : i64} {
  func.func @henet_kernel(%arg0: i32, %arg1: memref<30xf32, #tpu.memory_space<smem>>, %arg2: memref<8x8x128xf32, #tpu.memory_space<vmem>>, %arg3: memref<16x128xbf16, #tpu.memory_space<vmem>>, %arg4: memref<2x8x128xf32, #tpu.memory_space<vmem>>) attributes {dimension_semantics = [#tpu.dimension_semantics<parallel>], iteration_bounds = array<i64: 2>, scalar_prefetch = 0 : i64, scratch_operands = 0 : i64, tpu.core_type = #tpu.core_type<tc>, window_params = [{transform_indices = @transform_0, window_bounds = array<i64: 30>}, {transform_indices = @transform_1, window_bounds = array<i64: 8, 8, 128>}, {pipeline_mode = #tpu.pipeline_mode<synchronous>, transform_indices = @transform_2, window_bounds = array<i64: 16, 128>}, {transform_indices = @transform_3, window_bounds = array<i64: 2, 8, 128>}]} {
    %c0 = arith.constant 0 : index
    %0 = memref.load %arg1[%c0] : memref<30xf32, #tpu.memory_space<smem>>
    %c1 = arith.constant 1 : index
    %1 = memref.load %arg1[%c1] : memref<30xf32, #tpu.memory_space<smem>>
    %c2 = arith.constant 2 : index
    %2 = memref.load %arg1[%c2] : memref<30xf32, #tpu.memory_space<smem>>
    %c3 = arith.constant 3 : index
    %3 = memref.load %arg1[%c3] : memref<30xf32, #tpu.memory_space<smem>>
    %c4 = arith.constant 4 : index
    %4 = memref.load %arg1[%c4] : memref<30xf32, #tpu.memory_space<smem>>
    %c5 = arith.constant 5 : index
    %5 = memref.load %arg1[%c5] : memref<30xf32, #tpu.memory_space<smem>>
    %c6 = arith.constant 6 : index
    %6 = memref.load %arg1[%c6] : memref<30xf32, #tpu.memory_space<smem>>
    %c7 = arith.constant 7 : index
    %7 = memref.load %arg1[%c7] : memref<30xf32, #tpu.memory_space<smem>>
    %c8 = arith.constant 8 : index
    %8 = memref.load %arg1[%c8] : memref<30xf32, #tpu.memory_space<smem>>
    %c12 = arith.constant 12 : index
    %9 = memref.load %arg1[%c12] : memref<30xf32, #tpu.memory_space<smem>>
    %c13 = arith.constant 13 : index
    %10 = memref.load %arg1[%c13] : memref<30xf32, #tpu.memory_space<smem>>
    %c14 = arith.constant 14 : index
    %11 = memref.load %arg1[%c14] : memref<30xf32, #tpu.memory_space<smem>>
    %c15 = arith.constant 15 : index
    %12 = memref.load %arg1[%c15] : memref<30xf32, #tpu.memory_space<smem>>
    %c16 = arith.constant 16 : index
    %13 = memref.load %arg1[%c16] : memref<30xf32, #tpu.memory_space<smem>>
    %c17 = arith.constant 17 : index
    %14 = memref.load %arg1[%c17] : memref<30xf32, #tpu.memory_space<smem>>
    %c21 = arith.constant 21 : index
    %15 = memref.load %arg1[%c21] : memref<30xf32, #tpu.memory_space<smem>>
    %c22 = arith.constant 22 : index
    %16 = memref.load %arg1[%c22] : memref<30xf32, #tpu.memory_space<smem>>
    %c23 = arith.constant 23 : index
    %17 = memref.load %arg1[%c23] : memref<30xf32, #tpu.memory_space<smem>>
    %c27 = arith.constant 27 : index
    %18 = memref.load %arg1[%c27] : memref<30xf32, #tpu.memory_space<smem>>
    %c28 = arith.constant 28 : index
    %19 = memref.load %arg1[%c28] : memref<30xf32, #tpu.memory_space<smem>>
    %c29 = arith.constant 29 : index
    %20 = memref.load %arg1[%c29] : memref<30xf32, #tpu.memory_space<smem>>
    %c0_0 = arith.constant 0 : index
    %c0_1 = arith.constant 0 : index
    %c0_2 = arith.constant 0 : index
    %21 = vector.load %arg2[%c0_0, %c0_1, %c0_2] : memref<8x8x128xf32, #tpu.memory_space<vmem>>, vector<1x8x128xf32>
    %22 = vector.shape_cast %21 : vector<1x8x128xf32> to vector<8x128xf32>
    %c1_3 = arith.constant 1 : index
    %c0_4 = arith.constant 0 : index
    %c0_5 = arith.constant 0 : index
    %23 = vector.load %arg2[%c1_3, %c0_4, %c0_5] : memref<8x8x128xf32, #tpu.memory_space<vmem>>, vector<1x8x128xf32>
    %24 = vector.shape_cast %23 : vector<1x8x128xf32> to vector<8x128xf32>
    %c2_6 = arith.constant 2 : index
    %c0_7 = arith.constant 0 : index
    %c0_8 = arith.constant 0 : index
    %25 = vector.load %arg2[%c2_6, %c0_7, %c0_8] : memref<8x8x128xf32, #tpu.memory_space<vmem>>, vector<1x8x128xf32>
    %26 = vector.shape_cast %25 : vector<1x8x128xf32> to vector<8x128xf32>
    %c3_9 = arith.constant 3 : index
    %c0_10 = arith.constant 0 : index
    %c0_11 = arith.constant 0 : index
    %27 = vector.load %arg2[%c3_9, %c0_10, %c0_11] : memref<8x8x128xf32, #tpu.memory_space<vmem>>, vector<1x8x128xf32>
    %28 = vector.shape_cast %27 : vector<1x8x128xf32> to vector<8x128xf32>
    %c6_12 = arith.constant 6 : index
    %c0_13 = arith.constant 0 : index
    %c0_14 = arith.constant 0 : index
    %29 = vector.load %arg2[%c6_12, %c0_13, %c0_14] : memref<8x8x128xf32, #tpu.memory_space<vmem>>, vector<1x8x128xf32>
    %30 = vector.shape_cast %29 : vector<1x8x128xf32> to vector<8x128xf32>
    %31 = arith.addf %22, %26 : vector<8x128xf32>
    %cst = arith.constant 5.000000e-01 : f32
    %32 = vector.broadcast %cst : f32 to vector<8x128xf32>
    %33 = arith.mulf %31, %32 : vector<8x128xf32>
    %34 = tpu.concatenate %33, %33 in 0 : vector<8x128xf32>, vector<8x128xf32> -> vector<16x128xf32>
    %35 = tpu.concatenate %28, %24 in 0 : vector<8x128xf32>, vector<8x128xf32> -> vector<16x128xf32>
    %36 = vector.broadcast %4 : f32 to vector<16x128xf32>
    %37 = vector.broadcast %5 : f32 to vector<16x128xf32>
    %38 = vector.broadcast %8 : f32 to vector<16x128xf32>
    %39 = vector.broadcast %6 : f32 to vector<16x128xf32>
    %40 = vector.broadcast %7 : f32 to vector<16x128xf32>
    %cst_15 = arith.constant 2.000000e+00 : f32
    %41 = arith.mulf %cst_15, %6 : f32
    %42 = vector.broadcast %41 : f32 to vector<16x128xf32>
    %cst_16 = arith.constant 2.000000e+00 : f32
    %43 = arith.mulf %cst_16, %7 : f32
    %44 = vector.broadcast %43 : f32 to vector<16x128xf32>
    %45 = vector.broadcast %2 : f32 to vector<16x128xf32>
    %46 = arith.subf %34, %45 : vector<16x128xf32>
    %47 = vector.broadcast %19 : f32 to vector<16x128xf32>
    %48 = arith.mulf %46, %47 : vector<16x128xf32>
    %49 = vector.broadcast %3 : f32 to vector<16x128xf32>
    %50 = arith.subf %35, %49 : vector<16x128xf32>
    %51 = vector.broadcast %20 : f32 to vector<16x128xf32>
    %52 = arith.mulf %50, %51 : vector<16x128xf32>
    %53 = arith.mulf %48, %48 : vector<16x128xf32>
    %54 = arith.mulf %52, %52 : vector<16x128xf32>
    %55 = arith.addf %53, %54 : vector<16x128xf32>
    %56 = arith.mulf %38, %55 : vector<16x128xf32>
    %57 = arith.addf %56, %37 : vector<16x128xf32>
    %58 = arith.mulf %57, %55 : vector<16x128xf32>
    %59 = arith.addf %58, %36 : vector<16x128xf32>
    %60 = arith.mulf %59, %55 : vector<16x128xf32>
    %cst_17 = arith.constant 1.000000e+00 : f32
    %61 = vector.broadcast %cst_17 : f32 to vector<16x128xf32>
    %62 = arith.addf %61, %60 : vector<16x128xf32>
    %63 = tpu.reciprocal %62 {approx = true} : vector<16x128xf32> -> vector<16x128xf32>
    %64 = arith.mulf %62, %63 : vector<16x128xf32>
    %cst_18 = arith.constant 2.000000e+00 : f32
    %65 = vector.broadcast %cst_18 : f32 to vector<16x128xf32>
    %66 = arith.subf %65, %64 : vector<16x128xf32>
    %67 = arith.mulf %63, %66 : vector<16x128xf32>
    %68 = arith.mulf %42, %48 : vector<16x128xf32>
    %69 = arith.mulf %68, %52 : vector<16x128xf32>
    %cst_19 = arith.constant 2.000000e+00 : f32
    %70 = vector.broadcast %cst_19 : f32 to vector<16x128xf32>
    %71 = arith.mulf %70, %48 : vector<16x128xf32>
    %72 = arith.mulf %71, %48 : vector<16x128xf32>
    %73 = arith.addf %55, %72 : vector<16x128xf32>
    %74 = arith.mulf %40, %73 : vector<16x128xf32>
    %75 = arith.addf %69, %74 : vector<16x128xf32>
    %cst_20 = arith.constant 2.000000e+00 : f32
    %76 = vector.broadcast %cst_20 : f32 to vector<16x128xf32>
    %77 = arith.mulf %76, %52 : vector<16x128xf32>
    %78 = arith.mulf %77, %52 : vector<16x128xf32>
    %79 = arith.addf %55, %78 : vector<16x128xf32>
    %80 = arith.mulf %39, %79 : vector<16x128xf32>
    %81 = arith.mulf %44, %48 : vector<16x128xf32>
    %82 = arith.mulf %81, %52 : vector<16x128xf32>
    %83 = arith.addf %80, %82 : vector<16x128xf32>
    %84 = arith.subf %48, %75 : vector<16x128xf32>
    %85 = arith.mulf %84, %67 : vector<16x128xf32>
    %86 = arith.subf %52, %83 : vector<16x128xf32>
    %87 = arith.mulf %86, %67 : vector<16x128xf32>
    %88 = arith.mulf %85, %85 : vector<16x128xf32>
    %89 = arith.mulf %87, %87 : vector<16x128xf32>
    %90 = arith.addf %88, %89 : vector<16x128xf32>
    %91 = arith.mulf %38, %90 : vector<16x128xf32>
    %92 = arith.addf %91, %37 : vector<16x128xf32>
    %93 = arith.mulf %92, %90 : vector<16x128xf32>
    %94 = arith.addf %93, %36 : vector<16x128xf32>
    %95 = arith.mulf %94, %90 : vector<16x128xf32>
    %cst_21 = arith.constant 1.000000e+00 : f32
    %96 = vector.broadcast %cst_21 : f32 to vector<16x128xf32>
    %97 = arith.addf %96, %95 : vector<16x128xf32>
    %98 = tpu.reciprocal %97 {approx = true} : vector<16x128xf32> -> vector<16x128xf32>
    %99 = arith.mulf %97, %98 : vector<16x128xf32>
    %cst_22 = arith.constant 2.000000e+00 : f32
    %100 = vector.broadcast %cst_22 : f32 to vector<16x128xf32>
    %101 = arith.subf %100, %99 : vector<16x128xf32>
    %102 = arith.mulf %98, %101 : vector<16x128xf32>
    %103 = arith.mulf %42, %85 : vector<16x128xf32>
    %104 = arith.mulf %103, %87 : vector<16x128xf32>
    %cst_23 = arith.constant 2.000000e+00 : f32
    %105 = vector.broadcast %cst_23 : f32 to vector<16x128xf32>
    %106 = arith.mulf %105, %85 : vector<16x128xf32>
    %107 = arith.mulf %106, %85 : vector<16x128xf32>
    %108 = arith.addf %90, %107 : vector<16x128xf32>
    %109 = arith.mulf %40, %108 : vector<16x128xf32>
    %110 = arith.addf %104, %109 : vector<16x128xf32>
    %cst_24 = arith.constant 2.000000e+00 : f32
    %111 = vector.broadcast %cst_24 : f32 to vector<16x128xf32>
    %112 = arith.mulf %111, %87 : vector<16x128xf32>
    %113 = arith.mulf %112, %87 : vector<16x128xf32>
    %114 = arith.addf %90, %113 : vector<16x128xf32>
    %115 = arith.mulf %39, %114 : vector<16x128xf32>
    %116 = arith.mulf %44, %85 : vector<16x128xf32>
    %117 = arith.mulf %116, %87 : vector<16x128xf32>
    %118 = arith.addf %115, %117 : vector<16x128xf32>
    %119 = arith.subf %48, %110 : vector<16x128xf32>
    %120 = arith.mulf %119, %102 : vector<16x128xf32>
    %121 = arith.subf %52, %118 : vector<16x128xf32>
    %122 = arith.mulf %121, %102 : vector<16x128xf32>
    %123 = arith.mulf %120, %120 : vector<16x128xf32>
    %124 = arith.mulf %122, %122 : vector<16x128xf32>
    %125 = arith.addf %123, %124 : vector<16x128xf32>
    %126 = arith.mulf %38, %125 : vector<16x128xf32>
    %127 = arith.addf %126, %37 : vector<16x128xf32>
    %128 = arith.mulf %127, %125 : vector<16x128xf32>
    %129 = arith.addf %128, %36 : vector<16x128xf32>
    %130 = arith.mulf %129, %125 : vector<16x128xf32>
    %cst_25 = arith.constant 1.000000e+00 : f32
    %131 = vector.broadcast %cst_25 : f32 to vector<16x128xf32>
    %132 = arith.addf %131, %130 : vector<16x128xf32>
    %133 = tpu.reciprocal %132 {approx = true} : vector<16x128xf32> -> vector<16x128xf32>
    %134 = arith.mulf %132, %133 : vector<16x128xf32>
    %cst_26 = arith.constant 2.000000e+00 : f32
    %135 = vector.broadcast %cst_26 : f32 to vector<16x128xf32>
    %136 = arith.subf %135, %134 : vector<16x128xf32>
    %137 = arith.mulf %133, %136 : vector<16x128xf32>
    %138 = arith.mulf %42, %120 : vector<16x128xf32>
    %139 = arith.mulf %138, %122 : vector<16x128xf32>
    %cst_27 = arith.constant 2.000000e+00 : f32
    %140 = vector.broadcast %cst_27 : f32 to vector<16x128xf32>
    %141 = arith.mulf %140, %120 : vector<16x128xf32>
    %142 = arith.mulf %141, %120 : vector<16x128xf32>
    %143 = arith.addf %125, %142 : vector<16x128xf32>
    %144 = arith.mulf %40, %143 : vector<16x128xf32>
    %145 = arith.addf %139, %144 : vector<16x128xf32>
    %cst_28 = arith.constant 2.000000e+00 : f32
    %146 = vector.broadcast %cst_28 : f32 to vector<16x128xf32>
    %147 = arith.mulf %146, %122 : vector<16x128xf32>
    %148 = arith.mulf %147, %122 : vector<16x128xf32>
    %149 = arith.addf %125, %148 : vector<16x128xf32>
    %150 = arith.mulf %39, %149 : vector<16x128xf32>
    %151 = arith.mulf %44, %120 : vector<16x128xf32>
    %152 = arith.mulf %151, %122 : vector<16x128xf32>
    %153 = arith.addf %150, %152 : vector<16x128xf32>
    %154 = arith.subf %48, %145 : vector<16x128xf32>
    %155 = arith.mulf %154, %137 : vector<16x128xf32>
    %156 = arith.subf %52, %153 : vector<16x128xf32>
    %157 = arith.mulf %156, %137 : vector<16x128xf32>
    %158 = arith.mulf %155, %155 : vector<16x128xf32>
    %159 = arith.mulf %157, %157 : vector<16x128xf32>
    %160 = arith.addf %158, %159 : vector<16x128xf32>
    %161 = arith.mulf %38, %160 : vector<16x128xf32>
    %162 = arith.addf %161, %37 : vector<16x128xf32>
    %163 = arith.mulf %162, %160 : vector<16x128xf32>
    %164 = arith.addf %163, %36 : vector<16x128xf32>
    %165 = arith.mulf %164, %160 : vector<16x128xf32>
    %cst_29 = arith.constant 1.000000e+00 : f32
    %166 = vector.broadcast %cst_29 : f32 to vector<16x128xf32>
    %167 = arith.addf %166, %165 : vector<16x128xf32>
    %168 = tpu.reciprocal %167 {approx = true} : vector<16x128xf32> -> vector<16x128xf32>
    %169 = arith.mulf %167, %168 : vector<16x128xf32>
    %cst_30 = arith.constant 2.000000e+00 : f32
    %170 = vector.broadcast %cst_30 : f32 to vector<16x128xf32>
    %171 = arith.subf %170, %169 : vector<16x128xf32>
    %172 = arith.mulf %168, %171 : vector<16x128xf32>
    %173 = arith.mulf %42, %155 : vector<16x128xf32>
    %174 = arith.mulf %173, %157 : vector<16x128xf32>
    %cst_31 = arith.constant 2.000000e+00 : f32
    %175 = vector.broadcast %cst_31 : f32 to vector<16x128xf32>
    %176 = arith.mulf %175, %155 : vector<16x128xf32>
    %177 = arith.mulf %176, %155 : vector<16x128xf32>
    %178 = arith.addf %160, %177 : vector<16x128xf32>
    %179 = arith.mulf %40, %178 : vector<16x128xf32>
    %180 = arith.addf %174, %179 : vector<16x128xf32>
    %cst_32 = arith.constant 2.000000e+00 : f32
    %181 = vector.broadcast %cst_32 : f32 to vector<16x128xf32>
    %182 = arith.mulf %181, %157 : vector<16x128xf32>
    %183 = arith.mulf %182, %157 : vector<16x128xf32>
    %184 = arith.addf %160, %183 : vector<16x128xf32>
    %185 = arith.mulf %39, %184 : vector<16x128xf32>
    %186 = arith.mulf %44, %155 : vector<16x128xf32>
    %187 = arith.mulf %186, %157 : vector<16x128xf32>
    %188 = arith.addf %185, %187 : vector<16x128xf32>
    %189 = arith.subf %48, %180 : vector<16x128xf32>
    %190 = arith.mulf %189, %172 : vector<16x128xf32>
    %191 = arith.subf %52, %188 : vector<16x128xf32>
    %192 = arith.mulf %191, %172 : vector<16x128xf32>
    %193 = arith.mulf %190, %190 : vector<16x128xf32>
    %194 = arith.mulf %192, %192 : vector<16x128xf32>
    %195 = arith.addf %193, %194 : vector<16x128xf32>
    %196 = arith.mulf %38, %195 : vector<16x128xf32>
    %197 = arith.addf %196, %37 : vector<16x128xf32>
    %198 = arith.mulf %197, %195 : vector<16x128xf32>
    %199 = arith.addf %198, %36 : vector<16x128xf32>
    %200 = arith.mulf %199, %195 : vector<16x128xf32>
    %cst_33 = arith.constant 1.000000e+00 : f32
    %201 = vector.broadcast %cst_33 : f32 to vector<16x128xf32>
    %202 = arith.addf %201, %200 : vector<16x128xf32>
    %203 = tpu.reciprocal %202 {approx = true} : vector<16x128xf32> -> vector<16x128xf32>
    %204 = arith.mulf %202, %203 : vector<16x128xf32>
    %cst_34 = arith.constant 2.000000e+00 : f32
    %205 = vector.broadcast %cst_34 : f32 to vector<16x128xf32>
    %206 = arith.subf %205, %204 : vector<16x128xf32>
    %207 = arith.mulf %203, %206 : vector<16x128xf32>
    %208 = arith.mulf %42, %190 : vector<16x128xf32>
    %209 = arith.mulf %208, %192 : vector<16x128xf32>
    %cst_35 = arith.constant 2.000000e+00 : f32
    %210 = vector.broadcast %cst_35 : f32 to vector<16x128xf32>
    %211 = arith.mulf %210, %190 : vector<16x128xf32>
    %212 = arith.mulf %211, %190 : vector<16x128xf32>
    %213 = arith.addf %195, %212 : vector<16x128xf32>
    %214 = arith.mulf %40, %213 : vector<16x128xf32>
    %215 = arith.addf %209, %214 : vector<16x128xf32>
    %cst_36 = arith.constant 2.000000e+00 : f32
    %216 = vector.broadcast %cst_36 : f32 to vector<16x128xf32>
    %217 = arith.mulf %216, %192 : vector<16x128xf32>
    %218 = arith.mulf %217, %192 : vector<16x128xf32>
    %219 = arith.addf %195, %218 : vector<16x128xf32>
    %220 = arith.mulf %39, %219 : vector<16x128xf32>
    %221 = arith.mulf %44, %190 : vector<16x128xf32>
    %222 = arith.mulf %221, %192 : vector<16x128xf32>
    %223 = arith.addf %220, %222 : vector<16x128xf32>
    %224 = arith.subf %48, %215 : vector<16x128xf32>
    %225 = arith.mulf %224, %207 : vector<16x128xf32>
    %226 = arith.subf %52, %223 : vector<16x128xf32>
    %227 = arith.mulf %226, %207 : vector<16x128xf32>
    %228 = vector.broadcast %0 : f32 to vector<16x128xf32>
    %229 = arith.mulf %225, %228 : vector<16x128xf32>
    %230 = vector.broadcast %2 : f32 to vector<16x128xf32>
    %231 = arith.addf %229, %230 : vector<16x128xf32>
    %232 = vector.broadcast %1 : f32 to vector<16x128xf32>
    %233 = arith.mulf %227, %232 : vector<16x128xf32>
    %234 = vector.broadcast %3 : f32 to vector<16x128xf32>
    %235 = arith.addf %233, %234 : vector<16x128xf32>
    %236 = vector.extract_strided_slice %231 {offsets = [0, 0], sizes = [8, 128], strides = [1, 1]} : vector<16x128xf32> to vector<8x128xf32>
    %237 = vector.extract_strided_slice %235 {offsets = [0, 0], sizes = [8, 128], strides = [1, 1]} : vector<16x128xf32> to vector<8x128xf32>
    %cst_37 = arith.constant 0.000000e+00 : f32
    %238 = vector.broadcast %cst_37 : f32 to vector<8x128xf32>
    %239 = arith.cmpf oge, %236, %238 : vector<8x128xf32>
    %cst_38 = arith.constant 1.280000e+02 : f32
    %240 = vector.broadcast %cst_38 : f32 to vector<8x128xf32>
    %241 = arith.cmpf olt, %236, %240 : vector<8x128xf32>
    %242 = arith.andi %239, %241 : vector<8x128xi1>
    %cst_39 = arith.constant 0.000000e+00 : f32
    %243 = vector.broadcast %cst_39 : f32 to vector<8x128xf32>
    %244 = arith.cmpf oge, %237, %243 : vector<8x128xf32>
    %245 = arith.andi %242, %244 : vector<8x128xi1>
    %cst_40 = arith.constant 1.600000e+01 : f32
    %246 = vector.broadcast %cst_40 : f32 to vector<8x128xf32>
    %247 = arith.cmpf olt, %237, %246 : vector<8x128xf32>
    %248 = arith.andi %245, %247 : vector<8x128xi1>
    %249 = arith.fptosi %236 : vector<8x128xf32> to vector<8x128xi32>
    %c0_i32 = arith.constant 0 : i32
    %c127_i32 = arith.constant 127 : i32
    %250 = vector.broadcast %c0_i32 : i32 to vector<8x128xi32>
    %251 = arith.maxsi %250, %249 : vector<8x128xi32>
    %252 = vector.broadcast %c127_i32 : i32 to vector<8x128xi32>
    %253 = arith.minsi %252, %251 : vector<8x128xi32>
    %254 = arith.fptosi %237 : vector<8x128xf32> to vector<8x128xi32>
    %c0_i32_41 = arith.constant 0 : i32
    %c15_i32 = arith.constant 15 : i32
    %255 = vector.broadcast %c0_i32_41 : i32 to vector<8x128xi32>
    %256 = arith.maxsi %255, %254 : vector<8x128xi32>
    %257 = vector.broadcast %c15_i32 : i32 to vector<8x128xi32>
    %258 = arith.minsi %257, %256 : vector<8x128xi32>
    %c0_42 = arith.constant 0 : index
    %c0_43 = arith.constant 0 : index
    %259 = vector.load %arg3[%c0_42, %c0_43] : memref<16x128xbf16, #tpu.memory_space<vmem>>, vector<16x128xbf16>
    %260 = tpu.iota {dimensions = array<i32: 0>} : vector<16x128xi32>
    %261 = tpu.iota {dimensions = array<i32: 0>} : vector<128x128xi32>
    %262 = vector.extract_strided_slice %253 {offsets = [0, 0], sizes = [1, 128], strides = [1, 1]} : vector<8x128xi32> to vector<1x128xi32>
    %263 = vector.extract_strided_slice %258 {offsets = [0, 0], sizes = [1, 128], strides = [1, 1]} : vector<8x128xi32> to vector<1x128xi32>
    %264 = vector.broadcast %262 : vector<1x128xi32> to vector<128x128xi32>
    %265 = arith.cmpi eq, %261, %264 : vector<128x128xi32>
    %266 = arith.extui %265 : vector<128x128xi1> to vector<128x128xi32>
    %267 = arith.sitofp %266 : vector<128x128xi32> to vector<128x128xf32>
    %268 = arith.truncf %267 : vector<128x128xf32> to vector<128x128xbf16>
    %269 = vector.broadcast %263 : vector<1x128xi32> to vector<16x128xi32>
    %270 = arith.cmpi eq, %260, %269 : vector<16x128xi32>
    %271 = arith.extui %270 : vector<16x128xi1> to vector<16x128xi32>
    %272 = arith.sitofp %271 : vector<16x128xi32> to vector<16x128xf32>
    %cst_44 = arith.constant dense<0.000000e+00> : vector<16x128xf32>
    %273 = tpu.matmul %259, %268, %cst_44 {dimension_numbers = #tpu.dot_dimension_numbers<[1], [0], [0], [1], [0, 0, 1, 1], [], []>} : vector<16x128xbf16>, vector<128x128xbf16>, vector<16x128xf32> -> vector<16x128xf32>
    %274 = arith.mulf %273, %272 : vector<16x128xf32>
    %cst_45 = arith.constant dense<0.000000e+00> : vector<128xf32>
    %275 = vector.multi_reduction <add>, %274, %cst_45 [0] : vector<16x128xf32> to vector<128xf32>
    %276 = vector.shape_cast %275 : vector<128xf32> to vector<1x128xf32>
    %277 = vector.extract_strided_slice %253 {offsets = [1, 0], sizes = [1, 128], strides = [1, 1]} : vector<8x128xi32> to vector<1x128xi32>
    %278 = vector.extract_strided_slice %258 {offsets = [1, 0], sizes = [1, 128], strides = [1, 1]} : vector<8x128xi32> to vector<1x128xi32>
    %279 = vector.broadcast %277 : vector<1x128xi32> to vector<128x128xi32>
    %280 = arith.cmpi eq, %261, %279 : vector<128x128xi32>
    %281 = arith.extui %280 : vector<128x128xi1> to vector<128x128xi32>
    %282 = arith.sitofp %281 : vector<128x128xi32> to vector<128x128xf32>
    %283 = arith.truncf %282 : vector<128x128xf32> to vector<128x128xbf16>
    %284 = vector.broadcast %278 : vector<1x128xi32> to vector<16x128xi32>
    %285 = arith.cmpi eq, %260, %284 : vector<16x128xi32>
    %286 = arith.extui %285 : vector<16x128xi1> to vector<16x128xi32>
    %287 = arith.sitofp %286 : vector<16x128xi32> to vector<16x128xf32>
    %cst_46 = arith.constant dense<0.000000e+00> : vector<16x128xf32>
    %288 = tpu.matmul %259, %283, %cst_46 {dimension_numbers = #tpu.dot_dimension_numbers<[1], [0], [0], [1], [0, 0, 1, 1], [], []>} : vector<16x128xbf16>, vector<128x128xbf16>, vector<16x128xf32> -> vector<16x128xf32>
    %289 = arith.mulf %288, %287 : vector<16x128xf32>
    %cst_47 = arith.constant dense<0.000000e+00> : vector<128xf32>
    %290 = vector.multi_reduction <add>, %289, %cst_47 [0] : vector<16x128xf32> to vector<128xf32>
    %291 = vector.shape_cast %290 : vector<128xf32> to vector<1x128xf32>
    %292 = vector.extract_strided_slice %253 {offsets = [2, 0], sizes = [1, 128], strides = [1, 1]} : vector<8x128xi32> to vector<1x128xi32>
    %293 = vector.extract_strided_slice %258 {offsets = [2, 0], sizes = [1, 128], strides = [1, 1]} : vector<8x128xi32> to vector<1x128xi32>
    %294 = vector.broadcast %292 : vector<1x128xi32> to vector<128x128xi32>
    %295 = arith.cmpi eq, %261, %294 : vector<128x128xi32>
    %296 = arith.extui %295 : vector<128x128xi1> to vector<128x128xi32>
    %297 = arith.sitofp %296 : vector<128x128xi32> to vector<128x128xf32>
    %298 = arith.truncf %297 : vector<128x128xf32> to vector<128x128xbf16>
    %299 = vector.broadcast %293 : vector<1x128xi32> to vector<16x128xi32>
    %300 = arith.cmpi eq, %260, %299 : vector<16x128xi32>
    %301 = arith.extui %300 : vector<16x128xi1> to vector<16x128xi32>
    %302 = arith.sitofp %301 : vector<16x128xi32> to vector<16x128xf32>
    %cst_48 = arith.constant dense<0.000000e+00> : vector<16x128xf32>
    %303 = tpu.matmul %259, %298, %cst_48 {dimension_numbers = #tpu.dot_dimension_numbers<[1], [0], [0], [1], [0, 0, 1, 1], [], []>} : vector<16x128xbf16>, vector<128x128xbf16>, vector<16x128xf32> -> vector<16x128xf32>
    %304 = arith.mulf %303, %302 : vector<16x128xf32>
    %cst_49 = arith.constant dense<0.000000e+00> : vector<128xf32>
    %305 = vector.multi_reduction <add>, %304, %cst_49 [0] : vector<16x128xf32> to vector<128xf32>
    %306 = vector.shape_cast %305 : vector<128xf32> to vector<1x128xf32>
    %307 = vector.extract_strided_slice %253 {offsets = [3, 0], sizes = [1, 128], strides = [1, 1]} : vector<8x128xi32> to vector<1x128xi32>
    %308 = vector.extract_strided_slice %258 {offsets = [3, 0], sizes = [1, 128], strides = [1, 1]} : vector<8x128xi32> to vector<1x128xi32>
    %309 = vector.broadcast %307 : vector<1x128xi32> to vector<128x128xi32>
    %310 = arith.cmpi eq, %261, %309 : vector<128x128xi32>
    %311 = arith.extui %310 : vector<128x128xi1> to vector<128x128xi32>
    %312 = arith.sitofp %311 : vector<128x128xi32> to vector<128x128xf32>
    %313 = arith.truncf %312 : vector<128x128xf32> to vector<128x128xbf16>
    %314 = vector.broadcast %308 : vector<1x128xi32> to vector<16x128xi32>
    %315 = arith.cmpi eq, %260, %314 : vector<16x128xi32>
    %316 = arith.extui %315 : vector<16x128xi1> to vector<16x128xi32>
    %317 = arith.sitofp %316 : vector<16x128xi32> to vector<16x128xf32>
    %cst_50 = arith.constant dense<0.000000e+00> : vector<16x128xf32>
    %318 = tpu.matmul %259, %313, %cst_50 {dimension_numbers = #tpu.dot_dimension_numbers<[1], [0], [0], [1], [0, 0, 1, 1], [], []>} : vector<16x128xbf16>, vector<128x128xbf16>, vector<16x128xf32> -> vector<16x128xf32>
    %319 = arith.mulf %318, %317 : vector<16x128xf32>
    %cst_51 = arith.constant dense<0.000000e+00> : vector<128xf32>
    %320 = vector.multi_reduction <add>, %319, %cst_51 [0] : vector<16x128xf32> to vector<128xf32>
    %321 = vector.shape_cast %320 : vector<128xf32> to vector<1x128xf32>
    %322 = vector.extract_strided_slice %253 {offsets = [4, 0], sizes = [1, 128], strides = [1, 1]} : vector<8x128xi32> to vector<1x128xi32>
    %323 = vector.extract_strided_slice %258 {offsets = [4, 0], sizes = [1, 128], strides = [1, 1]} : vector<8x128xi32> to vector<1x128xi32>
    %324 = vector.broadcast %322 : vector<1x128xi32> to vector<128x128xi32>
    %325 = arith.cmpi eq, %261, %324 : vector<128x128xi32>
    %326 = arith.extui %325 : vector<128x128xi1> to vector<128x128xi32>
    %327 = arith.sitofp %326 : vector<128x128xi32> to vector<128x128xf32>
    %328 = arith.truncf %327 : vector<128x128xf32> to vector<128x128xbf16>
    %329 = vector.broadcast %323 : vector<1x128xi32> to vector<16x128xi32>
    %330 = arith.cmpi eq, %260, %329 : vector<16x128xi32>
    %331 = arith.extui %330 : vector<16x128xi1> to vector<16x128xi32>
    %332 = arith.sitofp %331 : vector<16x128xi32> to vector<16x128xf32>
    %cst_52 = arith.constant dense<0.000000e+00> : vector<16x128xf32>
    %333 = tpu.matmul %259, %328, %cst_52 {dimension_numbers = #tpu.dot_dimension_numbers<[1], [0], [0], [1], [0, 0, 1, 1], [], []>} : vector<16x128xbf16>, vector<128x128xbf16>, vector<16x128xf32> -> vector<16x128xf32>
    %334 = arith.mulf %333, %332 : vector<16x128xf32>
    %cst_53 = arith.constant dense<0.000000e+00> : vector<128xf32>
    %335 = vector.multi_reduction <add>, %334, %cst_53 [0] : vector<16x128xf32> to vector<128xf32>
    %336 = vector.shape_cast %335 : vector<128xf32> to vector<1x128xf32>
    %337 = vector.extract_strided_slice %253 {offsets = [5, 0], sizes = [1, 128], strides = [1, 1]} : vector<8x128xi32> to vector<1x128xi32>
    %338 = vector.extract_strided_slice %258 {offsets = [5, 0], sizes = [1, 128], strides = [1, 1]} : vector<8x128xi32> to vector<1x128xi32>
    %339 = vector.broadcast %337 : vector<1x128xi32> to vector<128x128xi32>
    %340 = arith.cmpi eq, %261, %339 : vector<128x128xi32>
    %341 = arith.extui %340 : vector<128x128xi1> to vector<128x128xi32>
    %342 = arith.sitofp %341 : vector<128x128xi32> to vector<128x128xf32>
    %343 = arith.truncf %342 : vector<128x128xf32> to vector<128x128xbf16>
    %344 = vector.broadcast %338 : vector<1x128xi32> to vector<16x128xi32>
    %345 = arith.cmpi eq, %260, %344 : vector<16x128xi32>
    %346 = arith.extui %345 : vector<16x128xi1> to vector<16x128xi32>
    %347 = arith.sitofp %346 : vector<16x128xi32> to vector<16x128xf32>
    %cst_54 = arith.constant dense<0.000000e+00> : vector<16x128xf32>
    %348 = tpu.matmul %259, %343, %cst_54 {dimension_numbers = #tpu.dot_dimension_numbers<[1], [0], [0], [1], [0, 0, 1, 1], [], []>} : vector<16x128xbf16>, vector<128x128xbf16>, vector<16x128xf32> -> vector<16x128xf32>
    %349 = arith.mulf %348, %347 : vector<16x128xf32>
    %cst_55 = arith.constant dense<0.000000e+00> : vector<128xf32>
    %350 = vector.multi_reduction <add>, %349, %cst_55 [0] : vector<16x128xf32> to vector<128xf32>
    %351 = vector.shape_cast %350 : vector<128xf32> to vector<1x128xf32>
    %352 = vector.extract_strided_slice %253 {offsets = [6, 0], sizes = [1, 128], strides = [1, 1]} : vector<8x128xi32> to vector<1x128xi32>
    %353 = vector.extract_strided_slice %258 {offsets = [6, 0], sizes = [1, 128], strides = [1, 1]} : vector<8x128xi32> to vector<1x128xi32>
    %354 = vector.broadcast %352 : vector<1x128xi32> to vector<128x128xi32>
    %355 = arith.cmpi eq, %261, %354 : vector<128x128xi32>
    %356 = arith.extui %355 : vector<128x128xi1> to vector<128x128xi32>
    %357 = arith.sitofp %356 : vector<128x128xi32> to vector<128x128xf32>
    %358 = arith.truncf %357 : vector<128x128xf32> to vector<128x128xbf16>
    %359 = vector.broadcast %353 : vector<1x128xi32> to vector<16x128xi32>
    %360 = arith.cmpi eq, %260, %359 : vector<16x128xi32>
    %361 = arith.extui %360 : vector<16x128xi1> to vector<16x128xi32>
    %362 = arith.sitofp %361 : vector<16x128xi32> to vector<16x128xf32>
    %cst_56 = arith.constant dense<0.000000e+00> : vector<16x128xf32>
    %363 = tpu.matmul %259, %358, %cst_56 {dimension_numbers = #tpu.dot_dimension_numbers<[1], [0], [0], [1], [0, 0, 1, 1], [], []>} : vector<16x128xbf16>, vector<128x128xbf16>, vector<16x128xf32> -> vector<16x128xf32>
    %364 = arith.mulf %363, %362 : vector<16x128xf32>
    %cst_57 = arith.constant dense<0.000000e+00> : vector<128xf32>
    %365 = vector.multi_reduction <add>, %364, %cst_57 [0] : vector<16x128xf32> to vector<128xf32>
    %366 = vector.shape_cast %365 : vector<128xf32> to vector<1x128xf32>
    %367 = vector.extract_strided_slice %253 {offsets = [7, 0], sizes = [1, 128], strides = [1, 1]} : vector<8x128xi32> to vector<1x128xi32>
    %368 = vector.extract_strided_slice %258 {offsets = [7, 0], sizes = [1, 128], strides = [1, 1]} : vector<8x128xi32> to vector<1x128xi32>
    %369 = vector.broadcast %367 : vector<1x128xi32> to vector<128x128xi32>
    %370 = arith.cmpi eq, %261, %369 : vector<128x128xi32>
    %371 = arith.extui %370 : vector<128x128xi1> to vector<128x128xi32>
    %372 = arith.sitofp %371 : vector<128x128xi32> to vector<128x128xf32>
    %373 = arith.truncf %372 : vector<128x128xf32> to vector<128x128xbf16>
    %374 = vector.broadcast %368 : vector<1x128xi32> to vector<16x128xi32>
    %375 = arith.cmpi eq, %260, %374 : vector<16x128xi32>
    %376 = arith.extui %375 : vector<16x128xi1> to vector<16x128xi32>
    %377 = arith.sitofp %376 : vector<16x128xi32> to vector<16x128xf32>
    %cst_58 = arith.constant dense<0.000000e+00> : vector<16x128xf32>
    %378 = tpu.matmul %259, %373, %cst_58 {dimension_numbers = #tpu.dot_dimension_numbers<[1], [0], [0], [1], [0, 0, 1, 1], [], []>} : vector<16x128xbf16>, vector<128x128xbf16>, vector<16x128xf32> -> vector<16x128xf32>
    %379 = arith.mulf %378, %377 : vector<16x128xf32>
    %cst_59 = arith.constant dense<0.000000e+00> : vector<128xf32>
    %380 = vector.multi_reduction <add>, %379, %cst_59 [0] : vector<16x128xf32> to vector<128xf32>
    %381 = vector.shape_cast %380 : vector<128xf32> to vector<1x128xf32>
    %382 = tpu.concatenate %276, %291, %306, %321, %336, %351, %366, %381 in 0 : vector<1x128xf32>, vector<1x128xf32>, vector<1x128xf32>, vector<1x128xf32>, vector<1x128xf32>, vector<1x128xf32>, vector<1x128xf32>, vector<1x128xf32> -> vector<8x128xf32>
    %383 = vector.broadcast %9 : f32 to vector<8x128xf32>
    %384 = arith.mulf %383, %236 : vector<8x128xf32>
    %385 = vector.broadcast %10 : f32 to vector<8x128xf32>
    %386 = arith.mulf %385, %237 : vector<8x128xf32>
    %387 = arith.addf %384, %386 : vector<8x128xf32>
    %388 = vector.broadcast %11 : f32 to vector<8x128xf32>
    %389 = arith.addf %387, %388 : vector<8x128xf32>
    %390 = vector.broadcast %12 : f32 to vector<8x128xf32>
    %391 = arith.mulf %390, %236 : vector<8x128xf32>
    %392 = vector.broadcast %13 : f32 to vector<8x128xf32>
    %393 = arith.mulf %392, %237 : vector<8x128xf32>
    %394 = arith.addf %391, %393 : vector<8x128xf32>
    %395 = vector.broadcast %14 : f32 to vector<8x128xf32>
    %396 = arith.addf %394, %395 : vector<8x128xf32>
    %397 = tpu.reciprocal %396 {approx = true} : vector<8x128xf32> -> vector<8x128xf32>
    %398 = arith.mulf %396, %397 : vector<8x128xf32>
    %cst_60 = arith.constant 2.000000e+00 : f32
    %399 = vector.broadcast %cst_60 : f32 to vector<8x128xf32>
    %400 = arith.subf %399, %398 : vector<8x128xf32>
    %401 = arith.mulf %397, %400 : vector<8x128xf32>
    %402 = arith.mulf %389, %401 : vector<8x128xf32>
    %403 = vector.broadcast %18 : f32 to vector<8x128xf32>
    %404 = arith.addf %402, %403 : vector<8x128xf32>
    %405 = vector.broadcast %15 : f32 to vector<16x128xf32>
    %406 = arith.mulf %405, %231 : vector<16x128xf32>
    %407 = vector.broadcast %16 : f32 to vector<16x128xf32>
    %408 = arith.mulf %407, %235 : vector<16x128xf32>
    %409 = arith.addf %406, %408 : vector<16x128xf32>
    %410 = vector.broadcast %17 : f32 to vector<16x128xf32>
    %411 = arith.addf %409, %410 : vector<16x128xf32>
    %412 = vector.extract_strided_slice %411 {offsets = [0, 0], sizes = [8, 128], strides = [1, 1]} : vector<16x128xf32> to vector<8x128xf32>
    %413 = vector.extract_strided_slice %411 {offsets = [8, 0], sizes = [8, 128], strides = [1, 1]} : vector<16x128xf32> to vector<8x128xf32>
    %414 = arith.subf %412, %413 : vector<8x128xf32>
    %415 = arith.mulf %404, %414 : vector<8x128xf32>
    %cst_61 = arith.constant 1.000000e+02 : f32
    %416 = vector.broadcast %cst_61 : f32 to vector<8x128xf32>
    %417 = arith.mulf %415, %416 : vector<8x128xf32>
    %418 = math.roundeven %417 : vector<8x128xf32>
    %cst_62 = arith.constant 0.00999999977 : f32
    %419 = vector.broadcast %cst_62 : f32 to vector<8x128xf32>
    %420 = arith.mulf %418, %419 : vector<8x128xf32>
    %cst_63 = arith.constant 1.000000e+00 : f32
    %421 = vector.broadcast %cst_63 : f32 to vector<8x128xf32>
    %422 = arith.subf %382, %421 : vector<8x128xf32>
    %423 = math.absf %422 : vector<8x128xf32>
    %cst_64 = arith.constant 5.000000e-01 : f32
    %424 = vector.broadcast %cst_64 : f32 to vector<8x128xf32>
    %425 = arith.cmpf olt, %423, %424 : vector<8x128xf32>
    %cst_65 = arith.constant 5.000000e-01 : f32
    %426 = vector.broadcast %cst_65 : f32 to vector<8x128xf32>
    %427 = arith.cmpf ogt, %30, %426 : vector<8x128xf32>
    %428 = arith.andi %425, %427 : vector<8x128xi1>
    %429 = arith.andi %428, %248 : vector<8x128xi1>
    %cst_66 = arith.constant 0.000000e+00 : f32
    %430 = vector.broadcast %cst_66 : f32 to vector<8x128xf32>
    %431 = arith.select %429, %420, %430 : vector<8x128xi1>, vector<8x128xf32>
    %c0_67 = arith.constant 0 : index
    %c0_68 = arith.constant 0 : index
    %c0_69 = arith.constant 0 : index
    %432 = vector.load %arg4[%c0_67, %c0_68, %c0_69] : memref<2x8x128xf32, #tpu.memory_space<vmem>>, vector<1x8x128xf32>
    %433 = vector.shape_cast %432 : vector<1x8x128xf32> to vector<8x128xf32>
    %434 = vector.shape_cast %431 : vector<8x128xf32> to vector<1x8x128xf32>
    tpu.vector_store %arg4[%c0_67, %c0_68, %c0_69], %434 {strides = array<i32>} : memref<2x8x128xf32, #tpu.memory_space<vmem>>, vector<1x8x128xf32>,
    %435 = arith.extui %429 : vector<8x128xi1> to vector<8x128xi32>
    %436 = arith.sitofp %435 : vector<8x128xi32> to vector<8x128xf32>
    %c1_70 = arith.constant 1 : index
    %c0_71 = arith.constant 0 : index
    %c0_72 = arith.constant 0 : index
    %437 = vector.load %arg4[%c1_70, %c0_71, %c0_72] : memref<2x8x128xf32, #tpu.memory_space<vmem>>, vector<1x8x128xf32>
    %438 = vector.shape_cast %437 : vector<1x8x128xf32> to vector<8x128xf32>
    %439 = vector.shape_cast %436 : vector<8x128xf32> to vector<1x8x128xf32>
    tpu.vector_store %arg4[%c1_70, %c0_71, %c0_72], %439 {strides = array<i32>} : memref<2x8x128xf32, #tpu.memory_space<vmem>>, vector<1x8x128xf32>,
    return
  }
  func.func @transform_0(%arg0: i32) -> i32 {
    %c0_i32 = arith.constant 0 : i32
    %c0_i32_0 = arith.constant 0 : i32
    return %c0_i32 : i32
  }
  func.func @transform_1(%arg0: i32) -> (i32, i32, i32) {
    %c0_i32 = arith.constant 0 : i32
    %c0_i32_0 = arith.constant 0 : i32
    %c0_i32_1 = arith.constant 0 : i32
    return %c0_i32, %arg0, %c0_i32_0 : i32, i32, i32
  }
  func.func @transform_2(%arg0: i32) -> (i32, i32) {
    %c0_i32 = arith.constant 0 : i32
    %c0_i32_0 = arith.constant 0 : i32
    %c0_i32_1 = arith.constant 0 : i32
    return %c0_i32, %c0_i32_0 : i32, i32
  }
  func.func @transform_3(%arg0: i32) -> (i32, i32, i32) {
    %c0_i32 = arith.constant 0 : i32
    %c0_i32_0 = arith.constant 0 : i32
    %c0_i32_1 = arith.constant 0 : i32
    return %c0_i32, %arg0, %c0_i32_0 : i32, i32, i32
  }
}

</mosaic_0001>

<llo_original>
// kernel: tpu_custom_call.1
$region0: #{tpu_custom_call.1}
  #allocation0 [shape = 'u32[]', space=smem, size = 0x4, offset = 0x4, fixed_abs, tag = 'smem constant byte address 0x4 - core index']
  #allocation1 [shape = 'u32[72,128]{1,0:T(1,128)}', space=vmem, size = 0x9000, scoped, tag = 'internal scratch']
  %s0 = inlined_call_operand.hbm [shape: f32[30], index: 0, kind: input, shape index: {}]
  %s1 = inlined_call_operand.hbm [shape: f32[8,16,128], index: 1, kind: input, shape index: {}]
  %s2 = inlined_call_operand.hbm [shape: bf16[16,128], index: 2, kind: input, shape index: {}]
  %s3 = inlined_call_operand.hbm [shape: f32[2,16,128], index: 3, kind: output, shape index: {}]
  %s4 = sld [smem:[#allocation0]]
  $region57: #{tpu_custom_call.1} parent=0
    _
  %s6 = ssub.s32 1, %s4
  %s7 = scalar_select 0, %s6, %s4
  $region1: #{tpu_custom_call.1} parent=0
    #allocation2 [shape = 'u8[512]{0}', space=smem, size = 0x200, scoped, tag = 'input window, operand 0, single buffered']
    #allocation3 [shape = 's32[2]{0}', space=sflag, size = 0x8, scoped, tag = 'scoped memory for tpu_custom_call.1']
    #allocation4 [shape = 's32[2]{0}', space=sflag, size = 0x8, scoped, tag = 'scoped memory for tpu_custom_call.1']
    #allocation5 [shape = 's32[2]{0}', space=sflag, size = 0x8, scoped, tag = 'scoped memory for tpu_custom_call.1']
    #allocation6 [shape = 'u8[65536]{0}', space=vmem, size = 0x10000, scoped, tag = 'input window, operand 1']
    #allocation7 [shape = 'u8[4096]{0}', space=vmem, size = 0x1000, scoped, tag = 'input window, operand 2, single buffered']
    #allocation8 [shape = 's32[1]{0}', space=sflag, size = 0x4, scoped, tag = 'scoped memory for tpu_custom_call.1']
    #allocation9 [shape = 'u8[16384]{0}', space=vmem, size = 0x4000, scoped, tag = 'output window, operand 0']
    %8 = vsyncpa [#allocation5], 0
    %9 = vsyncpa [#allocation3], 0
    %s10 = scalar_lea.sflag [#allocation3], 1
    %11 = vsyncpa %s10, 0
    %12 = vsyncpa [#allocation8], 0
    %13 = vsyncpa [#allocation4], 0
    %s14 = scalar_lea.sflag [#allocation4], 1
    %15 = vsyncpa %s14, 0
    loop: start=0, step=1, limit=4
    $region2: #{tpu_custom_call.1} parent=1 // loop_pre_header
      _
    $region3: #{tpu_custom_call.1} parent=1 // loop_header
      %s17 = sphi 0, %s21
      %p18 = scmp.ge.s32.totalorder %s17, 4
      %s25 = sphi 0, %s25
      %s27 = sphi 0, %s25
      %s28 = sphi 0, %s27
      %s42 = sphi 0, %s28
      %s48 = sphi 0, %s50
      %s51 = sphi 0, %s48
      %s52 = sphi 0, %s51
      %s68 = sphi 0, %s52
      %s72 = sphi 0, %s72
      %s74 = sphi 0, %s72
      %s75 = sphi 0, %s74
      %s89 = sphi 0, %s75
      %s95 = sphi 0, %s97
      %s98 = sphi 0, %s95
      %s99 = sphi 0, %s98
      %s115 = sphi 0, %s99
    $region4: #{tpu_custom_call.1} parent=1 // loop_header_branch
      %20 = sbr.rel (%p18) target = $region8
    $region5: #{tpu_custom_call.1} parent=1 // loop_body
      %s22 = ssub.s32 %s17, 1
      %s23 = ssub.s32 %s17, 2
      %s24 = sadd.s32 %s17, 1
      %s26 = sadd.s32 %s25, 1
      %p29 = scmp.eq.s32.totalorder %s17, 1
      %p30 = scmp.ne.s32.totalorder %s25, %s27
      %p31 = scmp.eq.s32.totalorder %s17, 0
      %p32 = por %p30, %p31
      %p33 = scmp.ne.s32.totalorder %s25, %s27
      %p34 = scmp.eq.s32.totalorder %s22, 1
      %p35 = por %p33, %p34
      %p36 = scmp.ne.s32.totalorder %s27, %s28
      %p37 = scmp.eq.s32.totalorder %s22, 0
      %p38 = por %p36, %p37
      %p39 = scmp.ne.s32.totalorder %s27, %s28
      %p40 = scmp.eq.s32.totalorder %s23, 1
      %p41 = por %p39, %p40
      %p43 = scmp.ne.s32.totalorder %s28, %s42
      %p44 = scmp.eq.s32.totalorder %s23, 0
      %p45 = por %p43, %p44
      %s46 = ssub.s32 %s17, %s24
      %p47 = scmp.eq.s32.totalorder %s46, 0
      %s49 = sadd.s32 %s48, 1
      %s50 = scalar_select %p47, %s48, %s49
      %p53 = pneg %p47
      %p54 = scmp.eq.s32.totalorder %s17, 1
      %p55 = por %p53, %p54
      %p56 = scmp.ne.s32.totalorder %s48, %s51
      %p57 = scmp.eq.s32.totalorder %s17, 0
      %p58 = por %p56, %p57
      %p59 = scmp.ne.s32.totalorder %s48, %s51
      %p60 = scmp.eq.s32.totalorder %s22, 1
      %p61 = por %p59, %p60
      %p62 = scmp.ne.s32.totalorder %s51, %s52
      %p63 = scmp.eq.s32.totalorder %s22, 0
      %p64 = por %p62, %p63
      %p65 = scmp.ne.s32.totalorder %s51, %s52
      %p66 = scmp.eq.s32.totalorder %s23, 1
      %p67 = por %p65, %p66
      %p69 = scmp.ne.s32.totalorder %s52, %s68
      %p70 = scmp.eq.s32.totalorder %s23, 0
      %p71 = por %p69, %p70
      %s73 = sadd.s32 %s72, 1
      %p76 = scmp.eq.s32.totalorder %s17, 1
      %p77 = scmp.ne.s32.totalorder %s72, %s74
      %p78 = scmp.eq.s32.totalorder %s17, 0
      %p79 = por %p77, %p78
      %p80 = scmp.ne.s32.totalorder %s72, %s74
      %p81 = scmp.eq.s32.totalorder %s22, 1
      %p82 = por %p80, %p81
      %p83 = scmp.ne.s32.totalorder %s74, %s75
      %p84 = scmp.eq.s32.totalorder %s22, 0
      %p85 = por %p83, %p84
      %p86 = scmp.ne.s32.totalorder %s74, %s75
      %p87 = scmp.eq.s32.totalorder %s23, 1
      %p88 = por %p86, %p87
      %p90 = scmp.ne.s32.totalorder %s75, %s89
      %p91 = scmp.eq.s32.totalorder %s23, 0
      %p92 = por %p90, %p91
      %s93 = ssub.s32 %s17, %s24
      %p94 = scmp.eq.s32.totalorder %s93, 0
      %s96 = sadd.s32 %s95, 1
      %s97 = scalar_select %p94, %s95, %s96
      %p100 = pneg %p94
      %p101 = scmp.eq.s32.totalorder %s17, 1
      %p102 = por %p100, %p101
      %p103 = scmp.ne.s32.totalorder %s95, %s98
      %p104 = scmp.eq.s32.totalorder %s17, 0
      %p105 = por %p103, %p104
      %p106 = scmp.ne.s32.totalorder %s95, %s98
      %p107 = scmp.eq.s32.totalorder %s22, 1
      %p108 = por %p106, %p107
      %p109 = scmp.ne.s32.totalorder %s98, %s99
      %p110 = scmp.eq.s32.totalorder %s22, 0
      %p111 = por %p109, %p110
      %p112 = scmp.ne.s32.totalorder %s98, %s99
      %p113 = scmp.eq.s32.totalorder %s23, 1
      %p114 = por %p112, %p113
      %p116 = scmp.ne.s32.totalorder %s99, %s115
      %p117 = scmp.eq.s32.totalorder %s23, 0
      %p118 = por %p116, %p117
      %p119 = scmp.le.s32.totalorder 1, %s17
      %p120 = scmp.lt.s32.totalorder %s17, 3
      %p121 = pnand %p119, %p120
      %p122 = pneg %p121
      // Predicated region
      $region9: #{tpu_custom_call.1} parent=5 // pred_check
        _
      $region10: #{tpu_custom_call.1} parent=5 // pred_check_branch
        %124 = sbr.rel (%p121) target = $region12
      $region11: #{tpu_custom_call.1} parent=5 // pred_region
        %s125 = ssub.s32 %s17, 1
        // Predicated region
        $region13: #{tpu_custom_call.1} parent=11 // pred_check
          %p126 = pneg %p38
        $region14: #{tpu_custom_call.1} parent=11 // pred_check_branch
          %128 = sbr.rel (%p126) target = $region16
        $region15: #{tpu_custom_call.1} parent=11 // pred_region
          %130 = vsyncadd [#allocation5], 0
          %s132 = sshll.u32 %s0, 4
          %s133 = int_to_ptr.hbm [resolvable:$true] %s132
          %135 = dma.hbm_to_smem %s133, 16, [#allocation2], [#allocation5]
        $region16: #{tpu_custom_call.1} parent=11 // pred_fallthru
          _
        // Predicated region
        $region17: #{tpu_custom_call.1} parent=11 // pred_check
          %p136 = pneg %p85
        $region18: #{tpu_custom_call.1} parent=11 // pred_check_branch
          %138 = sbr.rel (%p136) target = $region20
        $region19: #{tpu_custom_call.1} parent=11 // pred_region
          %140 = vsyncadd [#allocation8], 0
          %s141 = sshll.u32 %s2, 4
          %s142 = int_to_ptr.hbm [resolvable:$true] %s141
          %s143 = sshll.u32 [#allocation7], 4
          %s144 = int_to_ptr.vmem [resolvable:$true] %s143
          %149 = dma.hbm_to_vmem [thread:$0]  %s142, 128, %s144, [#allocation8], 64, 64, 4
        $region20: #{tpu_custom_call.1} parent=11 // pred_fallthru
          _
      $region12: #{tpu_custom_call.1} parent=5 // pred_fallthru
        _
      %p150 = scmp.lt.s32.totalorder %s17, 2
      // Predicated region
      $region21: #{tpu_custom_call.1} parent=5 // pred_check
        %p151 = pneg %p150
      $region22: #{tpu_custom_call.1} parent=5 // pred_check_branch
        %153 = sbr.rel (%p151) target = $region24
      $region23: #{tpu_custom_call.1} parent=5 // pred_region
        // Predicated region
        $region25: #{tpu_custom_call.1} parent=23 // pred_check
          %p154 = pneg %p58
        $region26: #{tpu_custom_call.1} parent=23 // pred_check_branch
          %156 = sbr.rel (%p154) target = $region28
        $region27: #{tpu_custom_call.1} parent=23 // pred_region
          %s157 = sand.u32 %s48, 1
          %s158 = scalar_lea.sflag [#allocation3], %s157
          %s159 = sand.u32 %s48, 1
          %s160 = smul.addr %s159, 64
          %s161 = scalar_lea.vmem [#allocation6], %s160
          %163 = vsyncadd %s158, 0
          %s164 = smul.addr %s17, 8
          %s165 = scalar_lea.hbm %s1, %s164
          %s166 = sshll.u32 %s165, 4
          %s167 = int_to_ptr.hbm [resolvable:$true] %s166
          %s168 = sshll.u32 %s161, 4
          %s169 = int_to_ptr.vmem [resolvable:$true] %s168
          %174 = dma.hbm_to_vmem [thread:$0]  %s167, 1024, %s169, %s158, 256, 128, 8
        $region28: #{tpu_custom_call.1} parent=23 // pred_fallthru
          _
      $region24: #{tpu_custom_call.1} parent=5 // pred_fallthru
        _
      %p175 = scmp.le.s32.totalorder 1, %s17
      %p176 = scmp.lt.s32.totalorder %s17, 3
      %p177 = pnand %p175, %p176
      %p178 = pneg %p177
      // Predicated region
      $region29: #{tpu_custom_call.1} parent=5 // pred_check
        _
      $region30: #{tpu_custom_call.1} parent=5 // pred_check_branch
        %180 = sbr.rel (%p177) target = $region32
      $region31: #{tpu_custom_call.1} parent=5 // pred_region
        %s181 = ssub.s32 %s17, 1
        // Predicated region
        $region33: #{tpu_custom_call.1} parent=31 // pred_check
          %p182 = pneg %p38
        $region34: #{tpu_custom_call.1} parent=31 // pred_check_branch
          %184 = sbr.rel (%p182) target = $region36
        $region35: #{tpu_custom_call.1} parent=31 // pred_region
          %186 = dma.done [#allocation5], 16
        $region36: #{tpu_custom_call.1} parent=31 // pred_fallthru
          _
        %s187 = sand.u32 %s51, 1
        %s188 = scalar_lea.sflag [#allocation3], %s187
        %s189 = sand.u32 %s51, 1
        %s190 = smul.addr %s189, 64
        %s191 = scalar_lea.vmem [#allocation6], %s190
        // Predicated region
        $region37: #{tpu_custom_call.1} parent=31 // pred_check
          %p192 = pneg %p64
        $region38: #{tpu_custom_call.1} parent=31 // pred_check_branch
          %194 = sbr.rel (%p192) target = $region40
        $region39: #{tpu_custom_call.1} parent=31 // pred_region
          %196 = dma.done %s188, 1024
        $region40: #{tpu_custom_call.1} parent=31 // pred_fallthru
          _
        // Predicated region
        $region41: #{tpu_custom_call.1} parent=31 // pred_check
          %p197 = pneg %p85
        $region42: #{tpu_custom_call.1} parent=31 // pred_check_branch
          %199 = sbr.rel (%p197) target = $region44
        $region43: #{tpu_custom_call.1} parent=31 // pred_region
          %201 = dma.done [#allocation8], 128
        $region44: #{tpu_custom_call.1} parent=31 // pred_fallthru
          _
        %202 = sfence
        %p203 = pneg %p38
        %p204 = pneg %p35
        %s205 = sand.u32 %s51, 1
        %s206 = scalar_lea.sflag [#allocation3], %s205
        %s207 = sand.u32 %s51, 1
        %s208 = smul.addr %s207, 64
        %s209 = scalar_lea.vmem [#allocation6], %s208
        %p210 = pneg %p64
        %p211 = pneg %p61
        %p212 = pneg %p85
        %p213 = pneg %p82
        %p214 = pneg %p111
        %p215 = pneg %p108
        %s216 = sand.u32 %s98, 1
        %s217 = scalar_lea.sflag [#allocation4], %s216
        %s218 = sand.u32 %s98, 1
        %s219 = smul.addr %s218, 16
        %s220 = scalar_lea.vmem [#allocation9], %s219
        %s221 = sld [smem:[#allocation2]]
        %s222 = sld [smem:[#allocation2 + $0x1]]
        %s223 = sld [smem:[#allocation2 + $0x2]]
        %s224 = sld [smem:[#allocation2 + $0x3]]
        %s225 = sld [smem:[#allocation2 + $0x4]]
        %s226 = sld [smem:[#allocation2 + $0x5]]
        %s227 = sld [smem:[#allocation2 + $0x6]]
        %s228 = sld [smem:[#allocation2 + $0x7]]
        %s229 = sld [smem:[#allocation2 + $0x8]]
        %s230 = sld [smem:[#allocation2 + $0xc]]
        %s231 = sld [smem:[#allocation2 + $0xd]]
        %s232 = sld [smem:[#allocation2 + $0xe]]
        %s233 = sld [smem:[#allocation2 + $0xf]]
        %s234 = sld [smem:[#allocation2 + $0x10]]
        %s235 = sld [smem:[#allocation2 + $0x11]]
        %s236 = sld [smem:[#allocation2 + $0x15]]
        %s237 = sld [smem:[#allocation2 + $0x16]]
        %s238 = sld [smem:[#allocation2 + $0x17]]
        %s239 = sld [smem:[#allocation2 + $0x1b]]
        %s240 = sld [smem:[#allocation2 + $0x1c]]
        %s241 = sld [smem:[#allocation2 + $0x1d]]
        %v242 = vld [vmem:[%s191] sm:$0xff]
        %s243 = scalar_lea.vmem %s191, 8 [#allocation6]
        %v244 = vld [vmem:[%s243] sm:$0xff]
        %s245 = scalar_lea.vmem %s191, 16 [#allocation6]
        %v246 = vld [vmem:[%s245] sm:$0xff]
        %s247 = scalar_lea.vmem %s191, 24 [#allocation6]
        %v248 = vld [vmem:[%s247] sm:$0xff]
        %s249 = scalar_lea.vmem %s191, 48 [#allocation6]
        %v250 = vld [vmem:[%s249] sm:$0xff]
        %v251 = vadd.f32 %v242, %v246
        %v252 = vmul.f32 %v251, 0.5
        %v253 = vstv %s225
        %v254 = vstv %s226
        %v255 = vstv %s229
        %v256 = vstv %s227
        %v257 = vstv %s228
        %s258 = smul.f32 %s227, 2.0
        %v259 = vstv %s258
        %s260 = smul.f32 %s228, 2.0
        %v261 = vstv %s260
        %v262 = vstv %s223
        %v263 = vsub.f32 %v252, %v262
        %v264 = vstv %s240
        %v265 = vmul.f32 %v263, %v264
        %v266 = vstv %s224
        %v267 = vsub.f32 %v248, %v266
        %v268 = vsub.f32 %v244, %v266
        %v269 = vstv %s241
        %v270 = vmul.f32 %v267, %v269
        %v271 = vmul.f32 %v268, %v269
        %v272 = vmul.f32 %v265, %v265
        %v273 = vmul.f32 %v270, %v270
        %v274 = vmul.f32 %v271, %v271
        %v275 = vadd.f32 %v272, %v273
        %v276 = vadd.f32 %v272, %v274
        %v277 = vmul.f32 %v255, %v275
        %v278 = vmul.f32 %v255, %v276
        %v279 = vadd.f32 %v277, %v254
        %v280 = vadd.f32 %v278, %v254
        %v281 = vmul.f32 %v279, %v275
        %v282 = vmul.f32 %v280, %v276
        %v283 = vadd.f32 %v281, %v253
        %v284 = vadd.f32 %v282, %v253
        %v285 = vmul.f32 %v283, %v275
        %v286 = vmul.f32 %v284, %v276
        %v287 = vadd.f32 %v285, 1.0
        %v288 = vadd.f32 %v286, 1.0
        %v289 = vrcp.pop %v287
        %v290 = vrcp.pop %v288
        %v291 = vmul.f32 %v287, %v289
        %v292 = vmul.f32 %v288, %v290
        %v293 = vsub.f32 2.0, %v291
        %v294 = vsub.f32 2.0, %v292
        %v295 = vmul.f32 %v289, %v293
        %v296 = vmul.f32 %v290, %v294
        %v297 = vmul.f32 %v259, %v265
        %v298 = vmul.f32 %v297, %v270
        %v299 = vmul.f32 %v297, %v271
        %v300 = vmul.f32 %v265, 2.0
        %v301 = vmul.f32 %v300, %v265
        %v302 = vadd.f32 %v275, %v301
        %v303 = vadd.f32 %v276, %v301
        %v304 = vmul.f32 %v257, %v302
        %v305 = vmul.f32 %v257, %v303
        %v306 = vadd.f32 %v298, %v304
        %v307 = vadd.f32 %v299, %v305
        %v308 = vmul.f32 %v270, 2.0
        %v309 = vmul.f32 %v271, 2.0
        %v310 = vmul.f32 %v308, %v270
        %v311 = vmul.f32 %v309, %v271
        %v312 = vadd.f32 %v275, %v310
        %v313 = vadd.f32 %v276, %v311
        %v314 = vmul.f32 %v256, %v312
        %v315 = vmul.f32 %v256, %v313
        %v316 = vmul.f32 %v261, %v265
        %v317 = vmul.f32 %v316, %v270
        %v318 = vmul.f32 %v316, %v271
        %v319 = vadd.f32 %v314, %v317
        %v320 = vadd.f32 %v315, %v318
        %v321 = vsub.f32 %v265, %v306
        %v322 = vsub.f32 %v265, %v307
        %v323 = vmul.f32 %v321, %v295
        %v324 = vmul.f32 %v322, %v296
        %v325 = vsub.f32 %v270, %v319
        %v326 = vsub.f32 %v271, %v320
        %v327 = vmul.f32 %v325, %v295
        %v328 = vmul.f32 %v326, %v296
        %v329 = vmul.f32 %v323, %v323
        %v330 = vmul.f32 %v324, %v324
        %v331 = vmul.f32 %v327, %v327
        %v332 = vmul.f32 %v328, %v328
        %v333 = vadd.f32 %v329, %v331
        %v334 = vadd.f32 %v330, %v332
        %v335 = vmul.f32 %v255, %v333
        %v336 = vmul.f32 %v255, %v334
        %v337 = vadd.f32 %v335, %v254
        %v338 = vadd.f32 %v336, %v254
        %v339 = vmul.f32 %v337, %v333
        %v340 = vmul.f32 %v338, %v334
        %v341 = vadd.f32 %v339, %v253
        %v342 = vadd.f32 %v340, %v253
        %v343 = vmul.f32 %v341, %v333
        %v344 = vmul.f32 %v342, %v334
        %v345 = vadd.f32 %v343, 1.0
        %v346 = vadd.f32 %v344, 1.0
        %v347 = vrcp.pop %v345
        %v348 = vrcp.pop %v346
        %v349 = vmul.f32 %v345, %v347
        %v350 = vmul.f32 %v346, %v348
        %v351 = vsub.f32 2.0, %v349
        %v352 = vsub.f32 2.0, %v350
        %v353 = vmul.f32 %v347, %v351
        %v354 = vmul.f32 %v348, %v352
        %v355 = vmul.f32 %v259, %v323
        %v356 = vmul.f32 %v259, %v324
        %v357 = vmul.f32 %v355, %v327
        %v358 = vmul.f32 %v356, %v328
        %v359 = vmul.f32 %v323, 2.0
        %v360 = vmul.f32 %v324, 2.0
        %v361 = vmul.f32 %v359, %v323
        %v362 = vmul.f32 %v360, %v324
        %v363 = vadd.f32 %v333, %v361
        %v364 = vadd.f32 %v334, %v362
        %v365 = vmul.f32 %v257, %v363
        %v366 = vmul.f32 %v257, %v364
        %v367 = vadd.f32 %v357, %v365
        %v368 = vadd.f32 %v358, %v366
        %v369 = vmul.f32 %v327, 2.0
        %v370 = vmul.f32 %v328, 2.0
        %v371 = vmul.f32 %v369, %v327
        %v372 = vmul.f32 %v370, %v328
        %v373 = vadd.f32 %v333, %v371
        %v374 = vadd.f32 %v334, %v372
        %v375 = vmul.f32 %v256, %v373
        %v376 = vmul.f32 %v256, %v374
        %v377 = vmul.f32 %v261, %v323
        %v378 = vmul.f32 %v261, %v324
        %v379 = vmul.f32 %v377, %v327
        %v380 = vmul.f32 %v378, %v328
        %v381 = vadd.f32 %v375, %v379
        %v382 = vadd.f32 %v376, %v380
        %v383 = vsub.f32 %v265, %v367
        %v384 = vsub.f32 %v265, %v368
        %v385 = vmul.f32 %v383, %v353
        %v386 = vmul.f32 %v384, %v354
        %v387 = vsub.f32 %v270, %v381
        %v388 = vsub.f32 %v271, %v382
        %v389 = vmul.f32 %v387, %v353
        %v390 = vmul.f32 %v388, %v354
        %v391 = vmul.f32 %v385, %v385
        %v392 = vmul.f32 %v386, %v386
        %v393 = vmul.f32 %v389, %v389
        %v394 = vmul.f32 %v390, %v390
        %v395 = vadd.f32 %v391, %v393
        %v396 = vadd.f32 %v392, %v394
        %v397 = vmul.f32 %v255, %v395
        %v398 = vmul.f32 %v255, %v396
        %v399 = vadd.f32 %v397, %v254
        %v400 = vadd.f32 %v398, %v254
        %v401 = vmul.f32 %v399, %v395
        %v402 = vmul.f32 %v400, %v396
        %v403 = vadd.f32 %v401, %v253
        %v404 = vadd.f32 %v402, %v253
        %v405 = vmul.f32 %v403, %v395
        %v406 = vmul.f32 %v404, %v396
        %v407 = vadd.f32 %v405, 1.0
        %v408 = vadd.f32 %v406, 1.0
        %v409 = vrcp.pop %v407
        %v410 = vrcp.pop %v408
        %v411 = vmul.f32 %v407, %v409
        %v412 = vmul.f32 %v408, %v410
        %v413 = vsub.f32 2.0, %v411
        %v414 = vsub.f32 2.0, %v412
        %v415 = vmul.f32 %v409, %v413
        %v416 = vmul.f32 %v410, %v414
        %v417 = vmul.f32 %v259, %v385
        %v418 = vmul.f32 %v259, %v386
        %v419 = vmul.f32 %v417, %v389
        %v420 = vmul.f32 %v418, %v390
        %v421 = vmul.f32 %v385, 2.0
        %v422 = vmul.f32 %v386, 2.0
        %v423 = vmul.f32 %v421, %v385
        %v424 = vmul.f32 %v422, %v386
        %v425 = vadd.f32 %v395, %v423
        %v426 = vadd.f32 %v396, %v424
        %v427 = vmul.f32 %v257, %v425
        %v428 = vmul.f32 %v257, %v426
        %v429 = vadd.f32 %v419, %v427
        %v430 = vadd.f32 %v420, %v428
        %v431 = vmul.f32 %v389, 2.0
        %v432 = vmul.f32 %v390, 2.0
        %v433 = vmul.f32 %v431, %v389
        %v434 = vmul.f32 %v432, %v390
        %v435 = vadd.f32 %v395, %v433
        %v436 = vadd.f32 %v396, %v434
        %v437 = vmul.f32 %v256, %v435
        %v438 = vmul.f32 %v256, %v436
        %v439 = vmul.f32 %v261, %v385
        %v440 = vmul.f32 %v261, %v386
        %v441 = vmul.f32 %v439, %v389
        %v442 = vmul.f32 %v440, %v390
        %v443 = vadd.f32 %v437, %v441
        %v444 = vadd.f32 %v438, %v442
        %v445 = vsub.f32 %v265, %v429
        %v446 = vsub.f32 %v265, %v430
        %v447 = vmul.f32 %v445, %v415
        %v448 = vmul.f32 %v446, %v416
        %v449 = vsub.f32 %v270, %v443
        %v450 = vsub.f32 %v271, %v444
        %v451 = vmul.f32 %v449, %v415
        %v452 = vmul.f32 %v450, %v416
        %v453 = vmul.f32 %v447, %v447
        %v454 = vmul.f32 %v448, %v448
        %v455 = vmul.f32 %v451, %v451
        %v456 = vmul.f32 %v452, %v452
        %v457 = vadd.f32 %v453, %v455
        %v458 = vadd.f32 %v454, %v456
        %v459 = vmul.f32 %v255, %v457
        %v460 = vmul.f32 %v255, %v458
        %v461 = vadd.f32 %v459, %v254
        %v462 = vadd.f32 %v460, %v254
        %v463 = vmul.f32 %v461, %v457
        %v464 = vmul.f32 %v462, %v458
        %v465 = vadd.f32 %v463, %v253
        %v466 = vadd.f32 %v464, %v253
        %v467 = vmul.f32 %v465, %v457
        %v468 = vmul.f32 %v466, %v458
        %v469 = vadd.f32 %v467, 1.0
        %v470 = vadd.f32 %v468, 1.0
        %v471 = vrcp.pop %v469
        %v472 = vrcp.pop %v470
        %v473 = vmul.f32 %v469, %v471
        %v474 = vmul.f32 %v470, %v472
        %v475 = vsub.f32 2.0, %v473
        %v476 = vsub.f32 2.0, %v474
        %v477 = vmul.f32 %v471, %v475
        %v478 = vmul.f32 %v472, %v476
        %v479 = vmul.f32 %v259, %v447
        %v480 = vmul.f32 %v259, %v448
        %v481 = vmul.f32 %v479, %v451
        %v482 = vmul.f32 %v480, %v452
        %v483 = vmul.f32 %v447, 2.0
        %v484 = vmul.f32 %v448, 2.0
        %v485 = vmul.f32 %v483, %v447
        %v486 = vmul.f32 %v484, %v448
        %v487 = vadd.f32 %v457, %v485
        %v488 = vadd.f32 %v458, %v486
        %v489 = vmul.f32 %v257, %v487
        %v490 = vmul.f32 %v257, %v488
        %v491 = vadd.f32 %v481, %v489
        %v492 = vadd.f32 %v482, %v490
        %v493 = vmul.f32 %v451, 2.0
        %v494 = vmul.f32 %v452, 2.0
        %v495 = vmul.f32 %v493, %v451
        %v496 = vmul.f32 %v494, %v452
        %v497 = vadd.f32 %v457, %v495
        %v498 = vadd.f32 %v458, %v496
        %v499 = vmul.f32 %v256, %v497
        %v500 = vmul.f32 %v256, %v498
        %v501 = vmul.f32 %v261, %v447
        %v502 = vmul.f32 %v261, %v448
        %v503 = vmul.f32 %v501, %v451
        %v504 = vmul.f32 %v502, %v452
        %v505 = vadd.f32 %v499, %v503
        %v506 = vadd.f32 %v500, %v504
        %v507 = vsub.f32 %v265, %v491
        %v508 = vsub.f32 %v265, %v492
        %v509 = vmul.f32 %v507, %v477
        %v510 = vmul.f32 %v508, %v478
        %v511 = vsub.f32 %v270, %v505
        %v512 = vsub.f32 %v271, %v506
        %v513 = vmul.f32 %v511, %v477
        %v514 = vmul.f32 %v512, %v478
        %v515 = vmul.f32 %v509, %v509
        %v516 = vmul.f32 %v510, %v510
        %v517 = vmul.f32 %v513, %v513
        %v518 = vmul.f32 %v514, %v514
        %v519 = vadd.f32 %v515, %v517
        %v520 = vadd.f32 %v516, %v518
        %v521 = vmul.f32 %v255, %v519
        %v522 = vmul.f32 %v255, %v520
        %v523 = vadd.f32 %v521, %v254
        %v524 = vadd.f32 %v522, %v254
        %v525 = vmul.f32 %v523, %v519
        %v526 = vmul.f32 %v524, %v520
        %v527 = vadd.f32 %v525, %v253
        %v528 = vadd.f32 %v526, %v253
        %v529 = vmul.f32 %v527, %v519
        %v530 = vmul.f32 %v528, %v520
        %v531 = vadd.f32 %v529, 1.0
        %v532 = vadd.f32 %v530, 1.0
        %v533 = vrcp.pop %v531
        %v534 = vrcp.pop %v532
        %v535 = vmul.f32 %v531, %v533
        %v536 = vmul.f32 %v532, %v534
        %v537 = vsub.f32 2.0, %v535
        %v538 = vsub.f32 2.0, %v536
        %v539 = vmul.f32 %v533, %v537
        %v540 = vmul.f32 %v534, %v538
        %v541 = vmul.f32 %v259, %v509
        %v542 = vmul.f32 %v259, %v510
        %v543 = vmul.f32 %v541, %v513
        %v544 = vmul.f32 %v542, %v514
        %v545 = vmul.f32 %v509, 2.0
        %v546 = vmul.f32 %v510, 2.0
        %v547 = vmul.f32 %v545, %v509
        %v548 = vmul.f32 %v546, %v510
        %v549 = vadd.f32 %v519, %v547
        %v550 = vadd.f32 %v520, %v548
        %v551 = vmul.f32 %v257, %v549
        %v552 = vmul.f32 %v257, %v550
        %v553 = vadd.f32 %v543, %v551
        %v554 = vadd.f32 %v544, %v552
        %v555 = vmul.f32 %v513, 2.0
        %v556 = vmul.f32 %v514, 2.0
        %v557 = vmul.f32 %v555, %v513
        %v558 = vmul.f32 %v556, %v514
        %v559 = vadd.f32 %v519, %v557
        %v560 = vadd.f32 %v520, %v558
        %v561 = vmul.f32 %v256, %v559
        %v562 = vmul.f32 %v256, %v560
        %v563 = vmul.f32 %v261, %v509
        %v564 = vmul.f32 %v261, %v510
        %v565 = vmul.f32 %v563, %v513
        %v566 = vmul.f32 %v564, %v514
        %v567 = vadd.f32 %v561, %v565
        %v568 = vadd.f32 %v562, %v566
        %v569 = vsub.f32 %v265, %v553
        %v570 = vsub.f32 %v265, %v554
        %v571 = vmul.f32 %v569, %v539
        %v572 = vmul.f32 %v570, %v540
        %v573 = vsub.f32 %v270, %v567
        %v574 = vsub.f32 %v271, %v568
        %v575 = vmul.f32 %v573, %v539
        %v576 = vmul.f32 %v574, %v540
        %v577 = vstv %s221
        %v578 = vmul.f32 %v571, %v577
        %v579 = vmul.f32 %v572, %v577
        %v580 = vadd.f32 %v578, %v262
        %v581 = vadd.f32 %v579, %v262
        %v582 = vstv %s222
        %v583 = vmul.f32 %v575, %v582
        %v584 = vmul.f32 %v576, %v582
        %v585 = vadd.f32 %v583, %v266
        %v586 = vadd.f32 %v584, %v266
        %vm587 = vcmp.ge.f32.partialorder %v580, 0.0
        %vm588 = vcmp.lt.f32.partialorder %v580, 128.0
        %vm589 = vmand %vm587, %vm588
        %vm590 = vcmp.ge.f32.partialorder %v585, 0.0
        %vm591 = vmand %vm589, %vm590
        %vm592 = vcmp.lt.f32.partialorder %v585, 16.0
        %vm593 = vmand %vm591, %vm592
        %v594 = vcvt.f32.s32.to.zero.pseudo %v580
        %vm595 = vcmp.gt.s32.totalorder %v594, 0
        %v596 = vsel %vm595, %v594, 0
        %vm597 = vcmp.lt.s32.totalorder %v596, 127
        %v598 = vsel %vm597, %v596, 127
        %v599 = vcvt.f32.s32.to.zero.pseudo %v585
        %vm600 = vcmp.gt.s32.totalorder %v599, 0
        %v601 = vsel %vm600, %v599, 0
        %vm602 = vcmp.lt.s32.totalorder %v601, 15
        %v603 = vsel %vm602, %v601, 15
        %v604 = vld [vmem:[#allocation7] sm:$0xf]
        %v605 = vld [vmem:[#allocation7 + $0x4] sm:$0xf]
        %v606 = vlaneseq
        %v607 = vshrl.u32 %v606, 7
        %v608 = vadd.s32 %v607, 8
        %v609 = vadd.s32 %v607, 16
        %v610 = vadd.s32 %v607, 24
        %v611 = vadd.s32 %v607, 32
        %v612 = vadd.s32 %v607, 40
        %v613 = vadd.s32 %v607, 48
        %v614 = vadd.s32 %v607, 56
        %v615 = vadd.s32 %v607, 64
        %v616 = vadd.s32 %v607, 72
        %v617 = vadd.s32 %v607, 80
        %v618 = vadd.s32 %v607, 88
        %v619 = vadd.s32 %v607, 96
        %v620 = vadd.s32 %v607, 104
        %v621 = vadd.s32 %v607, 112
        %v622 = vadd.s32 %v607, 120
        %v623 = vperm.slane %v598, 0
        %vm624 = vcmp.eq.s32.totalorder %v607, %v623
        %vm625 = vcmp.eq.s32.totalorder %v608, %v623
        %vm626 = vcmp.eq.s32.totalorder %v609, %v623
        %vm627 = vcmp.eq.s32.totalorder %v610, %v623
        %vm628 = vcmp.eq.s32.totalorder %v611, %v623
        %vm629 = vcmp.eq.s32.totalorder %v612, %v623
        %vm630 = vcmp.eq.s32.totalorder %v613, %v623
        %vm631 = vcmp.eq.s32.totalorder %v614, %v623
        %vm632 = vcmp.eq.s32.totalorder %v615, %v623
        %vm633 = vcmp.eq.s32.totalorder %v616, %v623
        %vm634 = vcmp.eq.s32.totalorder %v617, %v623
        %vm635 = vcmp.eq.s32.totalorder %v618, %v623
        %vm636 = vcmp.eq.s32.totalorder %v619, %v623
        %vm637 = vcmp.eq.s32.totalorder %v620, %v623
        %vm638 = vcmp.eq.s32.totalorder %v621, %v623
        %vm639 = vcmp.eq.s32.totalorder %v622, %v623
        %v640 = vsel %vm624, 1, 0
        %v641 = vsel %vm625, 1, 0
        %v642 = vsel %vm626, 1, 0
        %v643 = vsel %vm627, 1, 0
        %v644 = vsel %vm628, 1, 0
        %v645 = vsel %vm629, 1, 0
        %v646 = vsel %vm630, 1, 0
        %v647 = vsel %vm631, 1, 0
        %v648 = vsel %vm632, 1, 0
        %v649 = vsel %vm633, 1, 0
        %v650 = vsel %vm634, 1, 0
        %v651 = vsel %vm635, 1, 0
        %v652 = vsel %vm636, 1, 0
        %v653 = vsel %vm637, 1, 0
        %v654 = vsel %vm638, 1, 0
        %v655 = vsel %vm639, 1, 0
        %v656 = vcvt.s32.f32 %v640
        %v657 = vcvt.s32.f32 %v641
        %v658 = vcvt.s32.f32 %v642
        %v659 = vcvt.s32.f32 %v643
        %v660 = vcvt.s32.f32 %v644
        %v661 = vcvt.s32.f32 %v645
        %v662 = vcvt.s32.f32 %v646
        %v663 = vcvt.s32.f32 %v647
        %v664 = vcvt.s32.f32 %v648
        %v665 = vcvt.s32.f32 %v649
        %v666 = vcvt.s32.f32 %v650
        %v667 = vcvt.s32.f32 %v651
        %v668 = vcvt.s32.f32 %v652
        %v669 = vcvt.s32.f32 %v653
        %v670 = vcvt.s32.f32 %v654
        %v671 = vcvt.s32.f32 %v655
        %v672 = vpack.c.bf16 %v657, %v656
        %v673 = vpack.c.bf16 %v659, %v658
        %v674 = vpack.c.bf16 %v661, %v660
        %v675 = vpack.c.bf16 %v663, %v662
        %v676 = vpack.c.bf16 %v665, %v664
        %v677 = vpack.c.bf16 %v667, %v666
        %v678 = vpack.c.bf16 %v669, %v668
        %v679 = vpack.c.bf16 %v671, %v670
        %v680 = vperm.slane %v603, 0
        %vm681 = vcmp.eq.s32.totalorder %v607, %v680
        %vm682 = vcmp.eq.s32.totalorder %v608, %v680
        %v683 = vsel %vm681, 1, 0
        %v684 = vsel %vm682, 1, 0
        %v685 = vcvt.s32.f32 %v683
        %v686 = vcvt.s32.f32 %v684
        %v689 = vunpack.c.l.b16 %v604
        %v690 = vunpack.c.l.b16 %v605
        %v691 = vpack.c.b16 %v690, %v689
        %693 = vmatpush.bf16.msra.mxu0 %v679
        %694 = vmatpush.bf16.msra.mxu0 %v678
        %695 = vmatpush.bf16.msra.mxu0 %v677
        %696 = vmatpush.bf16.msra.mxu0 %v676
        %697 = vmatpush.bf16.msra.mxu0 %v675
        %698 = vmatpush.bf16.msra.mxu0 %v674
        %699 = vmatpush.bf16.msra.mxu0 %v673
        %700 = vmatpush.bf16.msra.mxu0 %v672
        %701 = vmatmul.bf16.gmra.mxu0 %v691
        %v702 = vpop.f32.mrf.mxu0
        %v703 = vadd.f32 0.0, %v702
        %v704 = vpop.f32.mrf.mxu0
        %v705 = vadd.f32 0.0, %v704
        %706 = vdwg.mxu0
        %v707 = vmul.f32 %v703, %v685
        %v708 = vmul.f32 %v705, %v686
        %v709 = vadd.f32 %v707, %v708
        %v710 = vrot.slane %v709, 4
        %v711 = vadd.f32 %v709, %v710
        %v712 = vrot.slane %v711, 2
        %v713 = vadd.f32 %v711, %v712
        %v714 = vrot.slane %v713, 1
        %v715 = vadd.f32 %v713, %v714
        %v716 = vperm.slane %v598, 1
        %vm717 = vcmp.eq.s32.totalorder %v607, %v716
        %vm718 = vcmp.eq.s32.totalorder %v608, %v716
        %vm719 = vcmp.eq.s32.totalorder %v609, %v716
        %vm720 = vcmp.eq.s32.totalorder %v610, %v716
        %vm721 = vcmp.eq.s32.totalorder %v611, %v716
        %vm722 = vcmp.eq.s32.totalorder %v612, %v716
        %vm723 = vcmp.eq.s32.totalorder %v613, %v716
        %vm724 = vcmp.eq.s32.totalorder %v614, %v716
        %vm725 = vcmp.eq.s32.totalorder %v615, %v716
        %vm726 = vcmp.eq.s32.totalorder %v616, %v716
        %vm727 = vcmp.eq.s32.totalorder %v617, %v716
        %vm728 = vcmp.eq.s32.totalorder %v618, %v716
        %vm729 = vcmp.eq.s32.totalorder %v619, %v716
        %vm730 = vcmp.eq.s32.totalorder %v620, %v716
        %vm731 = vcmp.eq.s32.totalorder %v621, %v716
        %vm732 = vcmp.eq.s32.totalorder %v622, %v716
        %v733 = vsel %vm717, 1, 0
        %v734 = vsel %vm718, 1, 0
        %v735 = vsel %vm719, 1, 0
        %v736 = vsel %vm720, 1, 0
        %v737 = vsel %vm721, 1, 0
        %v738 = vsel %vm722, 1, 0
        %v739 = vsel %vm723, 1, 0
        %v740 = vsel %vm724, 1, 0
        %v741 = vsel %vm725, 1, 0
        %v742 = vsel %vm726, 1, 0
        %v743 = vsel %vm727, 1, 0
        %v744 = vsel %vm728, 1, 0
        %v745 = vsel %vm729, 1, 0
        %v746 = vsel %vm730, 1, 0
        %v747 = vsel %vm731, 1, 0
        %v748 = vsel %vm732, 1, 0
        %v749 = vcvt.s32.f32 %v733
        %v750 = vcvt.s32.f32 %v734
        %v751 = vcvt.s32.f32 %v735
        %v752 = vcvt.s32.f32 %v736
        %v753 = vcvt.s32.f32 %v737
        %v754 = vcvt.s32.f32 %v738
        %v755 = vcvt.s32.f32 %v739
        %v756 = vcvt.s32.f32 %v740
        %v757 = vcvt.s32.f32 %v741
        %v758 = vcvt.s32.f32 %v742
        %v759 = vcvt.s32.f32 %v743
        %v760 = vcvt.s32.f32 %v744
        %v761 = vcvt.s32.f32 %v745
        %v762 = vcvt.s32.f32 %v746
        %v763 = vcvt.s32.f32 %v747
        %v764 = vcvt.s32.f32 %v748
        %v765 = vpack.c.bf16 %v750, %v749
        %v766 = vpack.c.bf16 %v752, %v751
        %v767 = vpack.c.bf16 %v754, %v753
        %v768 = vpack.c.bf16 %v756, %v755
        %v769 = vpack.c.bf16 %v758, %v757
        %v770 = vpack.c.bf16 %v760, %v759
        %v771 = vpack.c.bf16 %v762, %v761
        %v772 = vpack.c.bf16 %v764, %v763
        %v773 = vperm.slane %v603, 1
        %vm774 = vcmp.eq.s32.totalorder %v607, %v773
        %vm775 = vcmp.eq.s32.totalorder %v608, %v773
        %v776 = vsel %vm774, 1, 0
        %v777 = vsel %vm775, 1, 0
        %v778 = vcvt.s32.f32 %v776
        %v779 = vcvt.s32.f32 %v777
        %780 = vmatpush.bf16.msra.mxu0 %v772
        %781 = vmatpush.bf16.msra.mxu0 %v771
        %782 = vmatpush.bf16.msra.mxu0 %v770
        %783 = vmatpush.bf16.msra.mxu0 %v769
        %784 = vmatpush.bf16.msra.mxu0 %v768
        %785 = vmatpush.bf16.msra.mxu0 %v767
        %786 = vmatpush.bf16.msra.mxu0 %v766
        %787 = vmatpush.bf16.msra.mxu0 %v765
        %788 = vmatmul.bf16.gmra.mxu0 %v691
        %v789 = vpop.f32.mrf.mxu0
        %v790 = vadd.f32 0.0, %v789
        %v791 = vpop.f32.mrf.mxu0
        %v792 = vadd.f32 0.0, %v791
        %793 = vdwg.mxu0
        %v794 = vmul.f32 %v790, %v778
        %v795 = vmul.f32 %v792, %v779
        %v796 = vadd.f32 %v794, %v795
        %v797 = vrot.slane %v796, 4
        %v798 = vadd.f32 %v796, %v797
        %v799 = vrot.slane %v798, 2
        %v800 = vadd.f32 %v798, %v799
        %v801 = vrot.slane %v800, 1
        %v802 = vadd.f32 %v800, %v801
        %v803 = vperm.slane %v598, 2
        %vm804 = vcmp.eq.s32.totalorder %v607, %v803
        %vm805 = vcmp.eq.s32.totalorder %v608, %v803
        %vm806 = vcmp.eq.s32.totalorder %v609, %v803
        %vm807 = vcmp.eq.s32.totalorder %v610, %v803
        %vm808 = vcmp.eq.s32.totalorder %v611, %v803
        %vm809 = vcmp.eq.s32.totalorder %v612, %v803
        %vm810 = vcmp.eq.s32.totalorder %v613, %v803
        %vm811 = vcmp.eq.s32.totalorder %v614, %v803
        %vm812 = vcmp.eq.s32.totalorder %v615, %v803
        %vm813 = vcmp.eq.s32.totalorder %v616, %v803
        %vm814 = vcmp.eq.s32.totalorder %v617, %v803
        %vm815 = vcmp.eq.s32.totalorder %v618, %v803
        %vm816 = vcmp.eq.s32.totalorder %v619, %v803
        %vm817 = vcmp.eq.s32.totalorder %v620, %v803
        %vm818 = vcmp.eq.s32.totalorder %v621, %v803
        %vm819 = vcmp.eq.s32.totalorder %v622, %v803
        %v820 = vsel %vm804, 1, 0
        %v821 = vsel %vm805, 1, 0
        %v822 = vsel %vm806, 1, 0
        %v823 = vsel %vm807, 1, 0
        %v824 = vsel %vm808, 1, 0
        %v825 = vsel %vm809, 1, 0
        %v826 = vsel %vm810, 1, 0
        %v827 = vsel %vm811, 1, 0
        %v828 = vsel %vm812, 1, 0
        %v829 = vsel %vm813, 1, 0
        %v830 = vsel %vm814, 1, 0
        %v831 = vsel %vm815, 1, 0
        %v832 = vsel %vm816, 1, 0
        %v833 = vsel %vm817, 1, 0
        %v834 = vsel %vm818, 1, 0
        %v835 = vsel %vm819, 1, 0
        %v836 = vcvt.s32.f32 %v820
        %v837 = vcvt.s32.f32 %v821
        %v838 = vcvt.s32.f32 %v822
        %v839 = vcvt.s32.f32 %v823
        %v840 = vcvt.s32.f32 %v824
        %v841 = vcvt.s32.f32 %v825
        %v842 = vcvt.s32.f32 %v826
        %v843 = vcvt.s32.f32 %v827
        %v844 = vcvt.s32.f32 %v828
        %v845 = vcvt.s32.f32 %v829
        %v846 = vcvt.s32.f32 %v830
        %v847 = vcvt.s32.f32 %v831
        %v848 = vcvt.s32.f32 %v832
        %v849 = vcvt.s32.f32 %v833
        %v850 = vcvt.s32.f32 %v834
        %v851 = vcvt.s32.f32 %v835
        %v852 = vpack.c.bf16 %v837, %v836
        %v853 = vpack.c.bf16 %v839, %v838
        %v854 = vpack.c.bf16 %v841, %v840
        %v855 = vpack.c.bf16 %v843, %v842
        %v856 = vpack.c.bf16 %v845, %v844
        %v857 = vpack.c.bf16 %v847, %v846
        %v858 = vpack.c.bf16 %v849, %v848
        %v859 = vpack.c.bf16 %v851, %v850
        %v860 = vperm.slane %v603, 2
        %vm861 = vcmp.eq.s32.totalorder %v607, %v860
        %vm862 = vcmp.eq.s32.totalorder %v608, %v860
        %v863 = vsel %vm861, 1, 0
        %v864 = vsel %vm862, 1, 0
        %v865 = vcvt.s32.f32 %v863
        %v866 = vcvt.s32.f32 %v864
        %867 = vmatpush.bf16.msra.mxu0 %v859
        %868 = vmatpush.bf16.msra.mxu0 %v858
        %869 = vmatpush.bf16.msra.mxu0 %v857
        %870 = vmatpush.bf16.msra.mxu0 %v856
        %871 = vmatpush.bf16.msra.mxu0 %v855
        %872 = vmatpush.bf16.msra.mxu0 %v854
        %873 = vmatpush.bf16.msra.mxu0 %v853
        %874 = vmatpush.bf16.msra.mxu0 %v852
        %875 = vmatmul.bf16.gmra.mxu0 %v691
        %v876 = vpop.f32.mrf.mxu0
        %v877 = vadd.f32 0.0, %v876
        %v878 = vpop.f32.mrf.mxu0
        %v879 = vadd.f32 0.0, %v878
        %880 = vdwg.mxu0
        %v881 = vmul.f32 %v877, %v865
        %v882 = vmul.f32 %v879, %v866
        %v883 = vadd.f32 %v881, %v882
        %v884 = vrot.slane %v883, 4
        %v885 = vadd.f32 %v883, %v884
        %v886 = vrot.slane %v885, 2
        %v887 = vadd.f32 %v885, %v886
        %v888 = vrot.slane %v887, 1
        %v889 = vadd.f32 %v887, %v888
        %v890 = vperm.slane %v598, 3
        %vm891 = vcmp.eq.s32.totalorder %v607, %v890
        %vm892 = vcmp.eq.s32.totalorder %v608, %v890
        %vm893 = vcmp.eq.s32.totalorder %v609, %v890
        %vm894 = vcmp.eq.s32.totalorder %v610, %v890
        %vm895 = vcmp.eq.s32.totalorder %v611, %v890
        %vm896 = vcmp.eq.s32.totalorder %v612, %v890
        %vm897 = vcmp.eq.s32.totalorder %v613, %v890
        %vm898 = vcmp.eq.s32.totalorder %v614, %v890
        %vm899 = vcmp.eq.s32.totalorder %v615, %v890
        %vm900 = vcmp.eq.s32.totalorder %v616, %v890
        %vm901 = vcmp.eq.s32.totalorder %v617, %v890
        %vm902 = vcmp.eq.s32.totalorder %v618, %v890
        %vm903 = vcmp.eq.s32.totalorder %v619, %v890
        %vm904 = vcmp.eq.s32.totalorder %v620, %v890
        %vm905 = vcmp.eq.s32.totalorder %v621, %v890
        %vm906 = vcmp.eq.s32.totalorder %v622, %v890
        %v907 = vsel %vm891, 1, 0
        %v908 = vsel %vm892, 1, 0
        %v909 = vsel %vm893, 1, 0
        %v910 = vsel %vm894, 1, 0
        %v911 = vsel %vm895, 1, 0
        %v912 = vsel %vm896, 1, 0
        %v913 = vsel %vm897, 1, 0
        %v914 = vsel %vm898, 1, 0
        %v915 = vsel %vm899, 1, 0
        %v916 = vsel %vm900, 1, 0
        %v917 = vsel %vm901, 1, 0
        %v918 = vsel %vm902, 1, 0
        %v919 = vsel %vm903, 1, 0
        %v920 = vsel %vm904, 1, 0
        %v921 = vsel %vm905, 1, 0
        %v922 = vsel %vm906, 1, 0
        %v923 = vcvt.s32.f32 %v907
        %v924 = vcvt.s32.f32 %v908
        %v925 = vcvt.s32.f32 %v909
        %v926 = vcvt.s32.f32 %v910
        %v927 = vcvt.s32.f32 %v911
        %v928 = vcvt.s32.f32 %v912
        %v929 = vcvt.s32.f32 %v913
        %v930 = vcvt.s32.f32 %v914
        %v931 = vcvt.s32.f32 %v915
        %v932 = vcvt.s32.f32 %v916
        %v933 = vcvt.s32.f32 %v917
        %v934 = vcvt.s32.f32 %v918
        %v935 = vcvt.s32.f32 %v919
        %v936 = vcvt.s32.f32 %v920
        %v937 = vcvt.s32.f32 %v921
        %v938 = vcvt.s32.f32 %v922
        %v939 = vpack.c.bf16 %v924, %v923
        %v940 = vpack.c.bf16 %v926, %v925
        %v941 = vpack.c.bf16 %v928, %v927
        %v942 = vpack.c.bf16 %v930, %v929
        %v943 = vpack.c.bf16 %v932, %v931
        %v944 = vpack.c.bf16 %v934, %v933
        %v945 = vpack.c.bf16 %v936, %v935
        %v946 = vpack.c.bf16 %v938, %v937
        %v947 = vperm.slane %v603, 3
        %vm948 = vcmp.eq.s32.totalorder %v607, %v947
        %vm949 = vcmp.eq.s32.totalorder %v608, %v947
        %v950 = vsel %vm948, 1, 0
        %v951 = vsel %vm949, 1, 0
        %v952 = vcvt.s32.f32 %v950
        %v953 = vcvt.s32.f32 %v951
        %954 = vmatpush.bf16.msra.mxu0 %v946
        %955 = vmatpush.bf16.msra.mxu0 %v945
        %956 = vmatpush.bf16.msra.mxu0 %v944
        %957 = vmatpush.bf16.msra.mxu0 %v943
        %958 = vmatpush.bf16.msra.mxu0 %v942
        %959 = vmatpush.bf16.msra.mxu0 %v941
        %960 = vmatpush.bf16.msra.mxu0 %v940
        %961 = vmatpush.bf16.msra.mxu0 %v939
        %962 = vmatmul.bf16.gmra.mxu0 %v691
        %v963 = vpop.f32.mrf.mxu0
        %v964 = vadd.f32 0.0, %v963
        %v965 = vpop.f32.mrf.mxu0
        %v966 = vadd.f32 0.0, %v965
        %967 = vdwg.mxu0
        %v968 = vmul.f32 %v964, %v952
        %v969 = vmul.f32 %v966, %v953
        %v970 = vadd.f32 %v968, %v969
        %v971 = vrot.slane %v970, 4
        %v972 = vadd.f32 %v970, %v971
        %v973 = vrot.slane %v972, 2
        %v974 = vadd.f32 %v972, %v973
        %v975 = vrot.slane %v974, 1
        %v976 = vadd.f32 %v974, %v975
        %v977 = vperm.slane %v598, 4
        %vm978 = vcmp.eq.s32.totalorder %v607, %v977
        %vm979 = vcmp.eq.s32.totalorder %v608, %v977
        %vm980 = vcmp.eq.s32.totalorder %v609, %v977
        %vm981 = vcmp.eq.s32.totalorder %v610, %v977
        %vm982 = vcmp.eq.s32.totalorder %v611, %v977
        %vm983 = vcmp.eq.s32.totalorder %v612, %v977
        %vm984 = vcmp.eq.s32.totalorder %v613, %v977
        %vm985 = vcmp.eq.s32.totalorder %v614, %v977
        %vm986 = vcmp.eq.s32.totalorder %v615, %v977
        %vm987 = vcmp.eq.s32.totalorder %v616, %v977
        %vm988 = vcmp.eq.s32.totalorder %v617, %v977
        %vm989 = vcmp.eq.s32.totalorder %v618, %v977
        %vm990 = vcmp.eq.s32.totalorder %v619, %v977
        %vm991 = vcmp.eq.s32.totalorder %v620, %v977
        %vm992 = vcmp.eq.s32.totalorder %v621, %v977
        %vm993 = vcmp.eq.s32.totalorder %v622, %v977
        %v994 = vsel %vm978, 1, 0
        %v995 = vsel %vm979, 1, 0
        %v996 = vsel %vm980, 1, 0
        %v997 = vsel %vm981, 1, 0
        %v998 = vsel %vm982, 1, 0
        %v999 = vsel %vm983, 1, 0
        %v1000 = vsel %vm984, 1, 0
        %v1001 = vsel %vm985, 1, 0
        %v1002 = vsel %vm986, 1, 0
        %v1003 = vsel %vm987, 1, 0
        %v1004 = vsel %vm988, 1, 0
        %v1005 = vsel %vm989, 1, 0
        %v1006 = vsel %vm990, 1, 0
        %v1007 = vsel %vm991, 1, 0
        %v1008 = vsel %vm992, 1, 0
        %v1009 = vsel %vm993, 1, 0
        %v1010 = vcvt.s32.f32 %v994
        %v1011 = vcvt.s32.f32 %v995
        %v1012 = vcvt.s32.f32 %v996
        %v1013 = vcvt.s32.f32 %v997
        %v1014 = vcvt.s32.f32 %v998
        %v1015 = vcvt.s32.f32 %v999
        %v1016 = vcvt.s32.f32 %v1000
        %v1017 = vcvt.s32.f32 %v1001
        %v1018 = vcvt.s32.f32 %v1002
        %v1019 = vcvt.s32.f32 %v1003
        %v1020 = vcvt.s32.f32 %v1004
        %v1021 = vcvt.s32.f32 %v1005
        %v1022 = vcvt.s32.f32 %v1006
        %v1023 = vcvt.s32.f32 %v1007
        %v1024 = vcvt.s32.f32 %v1008
        %v1025 = vcvt.s32.f32 %v1009
        %v1026 = vpack.c.bf16 %v1011, %v1010
        %v1027 = vpack.c.bf16 %v1013, %v1012
        %v1028 = vpack.c.bf16 %v1015, %v1014
        %v1029 = vpack.c.bf16 %v1017, %v1016
        %v1030 = vpack.c.bf16 %v1019, %v1018
        %v1031 = vpack.c.bf16 %v1021, %v1020
        %v1032 = vpack.c.bf16 %v1023, %v1022
        %v1033 = vpack.c.bf16 %v1025, %v1024
        %v1034 = vperm.slane %v603, 4
        %vm1035 = vcmp.eq.s32.totalorder %v607, %v1034
        %vm1036 = vcmp.eq.s32.totalorder %v608, %v1034
        %v1037 = vsel %vm1035, 1, 0
        %v1038 = vsel %vm1036, 1, 0
        %v1039 = vcvt.s32.f32 %v1037
        %v1040 = vcvt.s32.f32 %v1038
        %1041 = vmatpush.bf16.msra.mxu0 %v1033
        %1042 = vmatpush.bf16.msra.mxu0 %v1032
        %1043 = vmatpush.bf16.msra.mxu0 %v1031
        %1044 = vmatpush.bf16.msra.mxu0 %v1030
        %1045 = vmatpush.bf16.msra.mxu0 %v1029
        %1046 = vmatpush.bf16.msra.mxu0 %v1028
        %1047 = vmatpush.bf16.msra.mxu0 %v1027
        %1048 = vmatpush.bf16.msra.mxu0 %v1026
        %1049 = vmatmul.bf16.gmra.mxu0 %v691
        %v1050 = vpop.f32.mrf.mxu0
        %v1051 = vadd.f32 0.0, %v1050
        %v1052 = vpop.f32.mrf.mxu0
        %v1053 = vadd.f32 0.0, %v1052
        %1054 = vdwg.mxu0
        %v1055 = vmul.f32 %v1051, %v1039
        %v1056 = vmul.f32 %v1053, %v1040
        %v1057 = vadd.f32 %v1055, %v1056
        %v1058 = vrot.slane %v1057, 4
        %v1059 = vadd.f32 %v1057, %v1058
        %v1060 = vrot.slane %v1059, 2
        %v1061 = vadd.f32 %v1059, %v1060
        %v1062 = vrot.slane %v1061, 1
        %v1063 = vadd.f32 %v1061, %v1062
        %v1064 = vperm.slane %v598, 5
        %vm1065 = vcmp.eq.s32.totalorder %v607, %v1064
        %vm1066 = vcmp.eq.s32.totalorder %v608, %v1064
        %vm1067 = vcmp.eq.s32.totalorder %v609, %v1064
        %vm1068 = vcmp.eq.s32.totalorder %v610, %v1064
        %vm1069 = vcmp.eq.s32.totalorder %v611, %v1064
        %vm1070 = vcmp.eq.s32.totalorder %v612, %v1064
        %vm1071 = vcmp.eq.s32.totalorder %v613, %v1064
        %vm1072 = vcmp.eq.s32.totalorder %v614, %v1064
        %vm1073 = vcmp.eq.s32.totalorder %v615, %v1064
        %vm1074 = vcmp.eq.s32.totalorder %v616, %v1064
        %vm1075 = vcmp.eq.s32.totalorder %v617, %v1064
        %vm1076 = vcmp.eq.s32.totalorder %v618, %v1064
        %vm1077 = vcmp.eq.s32.totalorder %v619, %v1064
        %vm1078 = vcmp.eq.s32.totalorder %v620, %v1064
        %vm1079 = vcmp.eq.s32.totalorder %v621, %v1064
        %vm1080 = vcmp.eq.s32.totalorder %v622, %v1064
        %v1081 = vsel %vm1065, 1, 0
        %v1082 = vsel %vm1066, 1, 0
        %v1083 = vsel %vm1067, 1, 0
        %v1084 = vsel %vm1068, 1, 0
        %v1085 = vsel %vm1069, 1, 0
        %v1086 = vsel %vm1070, 1, 0
        %v1087 = vsel %vm1071, 1, 0
        %v1088 = vsel %vm1072, 1, 0
        %v1089 = vsel %vm1073, 1, 0
        %v1090 = vsel %vm1074, 1, 0
        %v1091 = vsel %vm1075, 1, 0
        %v1092 = vsel %vm1076, 1, 0
        %v1093 = vsel %vm1077, 1, 0
        %v1094 = vsel %vm1078, 1, 0
        %v1095 = vsel %vm1079, 1, 0
        %v1096 = vsel %vm1080, 1, 0
        %v1097 = vcvt.s32.f32 %v1081
        %v1098 = vcvt.s32.f32 %v1082
        %v1099 = vcvt.s32.f32 %v1083
        %v1100 = vcvt.s32.f32 %v1084
        %v1101 = vcvt.s32.f32 %v1085
        %v1102 = vcvt.s32.f32 %v1086
        %v1103 = vcvt.s32.f32 %v1087
        %v1104 = vcvt.s32.f32 %v1088
        %v1105 = vcvt.s32.f32 %v1089
        %v1106 = vcvt.s32.f32 %v1090
        %v1107 = vcvt.s32.f32 %v1091
        %v1108 = vcvt.s32.f32 %v1092
        %v1109 = vcvt.s32.f32 %v1093
        %v1110 = vcvt.s32.f32 %v1094
        %v1111 = vcvt.s32.f32 %v1095
        %v1112 = vcvt.s32.f32 %v1096
        %v1113 = vpack.c.bf16 %v1098, %v1097
        %v1114 = vpack.c.bf16 %v1100, %v1099
        %v1115 = vpack.c.bf16 %v1102, %v1101
        %v1116 = vpack.c.bf16 %v1104, %v1103
        %v1117 = vpack.c.bf16 %v1106, %v1105
        %v1118 = vpack.c.bf16 %v1108, %v1107
        %v1119 = vpack.c.bf16 %v1110, %v1109
        %v1120 = vpack.c.bf16 %v1112, %v1111
        %v1121 = vperm.slane %v603, 5
        %vm1122 = vcmp.eq.s32.totalorder %v607, %v1121
        %vm1123 = vcmp.eq.s32.totalorder %v608, %v1121
        %v1124 = vsel %vm1122, 1, 0
        %v1125 = vsel %vm1123, 1, 0
        %v1126 = vcvt.s32.f32 %v1124
        %v1127 = vcvt.s32.f32 %v1125
        %1128 = vmatpush.bf16.msra.mxu0 %v1120
        %1129 = vmatpush.bf16.msra.mxu0 %v1119
        %1130 = vmatpush.bf16.msra.mxu0 %v1118
        %1131 = vmatpush.bf16.msra.mxu0 %v1117
        %1132 = vmatpush.bf16.msra.mxu0 %v1116
        %1133 = vmatpush.bf16.msra.mxu0 %v1115
        %1134 = vmatpush.bf16.msra.mxu0 %v1114
        %1135 = vmatpush.bf16.msra.mxu0 %v1113
        %1136 = vmatmul.bf16.gmra.mxu0 %v691
        %v1137 = vpop.f32.mrf.mxu0
        %v1138 = vadd.f32 0.0, %v1137
        %v1139 = vpop.f32.mrf.mxu0
        %v1140 = vadd.f32 0.0, %v1139
        %1141 = vdwg.mxu0
        %v1142 = vmul.f32 %v1138, %v1126
        %v1143 = vmul.f32 %v1140, %v1127
        %v1144 = vadd.f32 %v1142, %v1143
        %v1145 = vrot.slane %v1144, 4
        %v1146 = vadd.f32 %v1144, %v1145
        %v1147 = vrot.slane %v1146, 2
        %v1148 = vadd.f32 %v1146, %v1147
        %v1149 = vrot.slane %v1148, 1
        %v1150 = vadd.f32 %v1148, %v1149
        %v1151 = vperm.slane %v598, 6
        %vm1152 = vcmp.eq.s32.totalorder %v607, %v1151
        %vm1153 = vcmp.eq.s32.totalorder %v608, %v1151
        %vm1154 = vcmp.eq.s32.totalorder %v609, %v1151
        %vm1155 = vcmp.eq.s32.totalorder %v610, %v1151
        %vm1156 = vcmp.eq.s32.totalorder %v611, %v1151
        %vm1157 = vcmp.eq.s32.totalorder %v612, %v1151
        %vm1158 = vcmp.eq.s32.totalorder %v613, %v1151
        %vm1159 = vcmp.eq.s32.totalorder %v614, %v1151
        %vm1160 = vcmp.eq.s32.totalorder %v615, %v1151
        %vm1161 = vcmp.eq.s32.totalorder %v616, %v1151
        %vm1162 = vcmp.eq.s32.totalorder %v617, %v1151
        %vm1163 = vcmp.eq.s32.totalorder %v618, %v1151
        %vm1164 = vcmp.eq.s32.totalorder %v619, %v1151
        %vm1165 = vcmp.eq.s32.totalorder %v620, %v1151
        %vm1166 = vcmp.eq.s32.totalorder %v621, %v1151
        %vm1167 = vcmp.eq.s32.totalorder %v622, %v1151
        %v1168 = vsel %vm1152, 1, 0
        %v1169 = vsel %vm1153, 1, 0
        %v1170 = vsel %vm1154, 1, 0
        %v1171 = vsel %vm1155, 1, 0
        %v1172 = vsel %vm1156, 1, 0
        %v1173 = vsel %vm1157, 1, 0
        %v1174 = vsel %vm1158, 1, 0
        %v1175 = vsel %vm1159, 1, 0
        %v1176 = vsel %vm1160, 1, 0
        %v1177 = vsel %vm1161, 1, 0
        %v1178 = vsel %vm1162, 1, 0
        %v1179 = vsel %vm1163, 1, 0
        %v1180 = vsel %vm1164, 1, 0
        %v1181 = vsel %vm1165, 1, 0
        %v1182 = vsel %vm1166, 1, 0
        %v1183 = vsel %vm1167, 1, 0
        %v1184 = vcvt.s32.f32 %v1168
        %v1185 = vcvt.s32.f32 %v1169
        %v1186 = vcvt.s32.f32 %v1170
        %v1187 = vcvt.s32.f32 %v1171
        %v1188 = vcvt.s32.f32 %v1172
        %v1189 = vcvt.s32.f32 %v1173
        %v1190 = vcvt.s32.f32 %v1174
        %v1191 = vcvt.s32.f32 %v1175
        %v1192 = vcvt.s32.f32 %v1176
        %v1193 = vcvt.s32.f32 %v1177
        %v1194 = vcvt.s32.f32 %v1178
        %v1195 = vcvt.s32.f32 %v1179
        %v1196 = vcvt.s32.f32 %v1180
        %v1197 = vcvt.s32.f32 %v1181
        %v1198 = vcvt.s32.f32 %v1182
        %v1199 = vcvt.s32.f32 %v1183
        %v1200 = vpack.c.bf16 %v1185, %v1184
        %v1201 = vpack.c.bf16 %v1187, %v1186
        %v1202 = vpack.c.bf16 %v1189, %v1188
        %v1203 = vpack.c.bf16 %v1191, %v1190
        %v1204 = vpack.c.bf16 %v1193, %v1192
        %v1205 = vpack.c.bf16 %v1195, %v1194
        %v1206 = vpack.c.bf16 %v1197, %v1196
        %v1207 = vpack.c.bf16 %v1199, %v1198
        %v1208 = vperm.slane %v603, 6
        %vm1209 = vcmp.eq.s32.totalorder %v607, %v1208
        %vm1210 = vcmp.eq.s32.totalorder %v608, %v1208
        %v1211 = vsel %vm1209, 1, 0
        %v1212 = vsel %vm1210, 1, 0
        %v1213 = vcvt.s32.f32 %v1211
        %v1214 = vcvt.s32.f32 %v1212
        %1215 = vmatpush.bf16.msra.mxu0 %v1207
        %1216 = vmatpush.bf16.msra.mxu0 %v1206
        %1217 = vmatpush.bf16.msra.mxu0 %v1205
        %1218 = vmatpush.bf16.msra.mxu0 %v1204
        %1219 = vmatpush.bf16.msra.mxu0 %v1203
        %1220 = vmatpush.bf16.msra.mxu0 %v1202
        %1221 = vmatpush.bf16.msra.mxu0 %v1201
        %1222 = vmatpush.bf16.msra.mxu0 %v1200
        %1223 = vmatmul.bf16.gmra.mxu0 %v691
        %v1224 = vpop.f32.mrf.mxu0
        %v1225 = vadd.f32 0.0, %v1224
        %v1226 = vpop.f32.mrf.mxu0
        %v1227 = vadd.f32 0.0, %v1226
        %1228 = vdwg.mxu0
        %v1229 = vmul.f32 %v1225, %v1213
        %v1230 = vmul.f32 %v1227, %v1214
        %v1231 = vadd.f32 %v1229, %v1230
        %v1232 = vrot.slane %v1231, 4
        %v1233 = vadd.f32 %v1231, %v1232
        %v1234 = vrot.slane %v1233, 2
        %v1235 = vadd.f32 %v1233, %v1234
        %v1236 = vrot.slane %v1235, 1
        %v1237 = vadd.f32 %v1235, %v1236
        %v1238 = vperm.slane %v598, 7
        %vm1239 = vcmp.eq.s32.totalorder %v607, %v1238
        %vm1240 = vcmp.eq.s32.totalorder %v608, %v1238
        %vm1241 = vcmp.eq.s32.totalorder %v609, %v1238
        %vm1242 = vcmp.eq.s32.totalorder %v610, %v1238
        %vm1243 = vcmp.eq.s32.totalorder %v611, %v1238
        %vm1244 = vcmp.eq.s32.totalorder %v612, %v1238
        %vm1245 = vcmp.eq.s32.totalorder %v613, %v1238
        %vm1246 = vcmp.eq.s32.totalorder %v614, %v1238
        %vm1247 = vcmp.eq.s32.totalorder %v615, %v1238
        %vm1248 = vcmp.eq.s32.totalorder %v616, %v1238
        %vm1249 = vcmp.eq.s32.totalorder %v617, %v1238
        %vm1250 = vcmp.eq.s32.totalorder %v618, %v1238
        %vm1251 = vcmp.eq.s32.totalorder %v619, %v1238
        %vm1252 = vcmp.eq.s32.totalorder %v620, %v1238
        %vm1253 = vcmp.eq.s32.totalorder %v621, %v1238
        %vm1254 = vcmp.eq.s32.totalorder %v622, %v1238
        %v1255 = vsel %vm1239, 1, 0
        %v1256 = vsel %vm1240, 1, 0
        %v1257 = vsel %vm1241, 1, 0
        %v1258 = vsel %vm1242, 1, 0
        %v1259 = vsel %vm1243, 1, 0
        %v1260 = vsel %vm1244, 1, 0
        %v1261 = vsel %vm1245, 1, 0
        %v1262 = vsel %vm1246, 1, 0
        %v1263 = vsel %vm1247, 1, 0
        %v1264 = vsel %vm1248, 1, 0
        %v1265 = vsel %vm1249, 1, 0
        %v1266 = vsel %vm1250, 1, 0
        %v1267 = vsel %vm1251, 1, 0
        %v1268 = vsel %vm1252, 1, 0
        %v1269 = vsel %vm1253, 1, 0
        %v1270 = vsel %vm1254, 1, 0
        %v1271 = vcvt.s32.f32 %v1255
        %v1272 = vcvt.s32.f32 %v1256
        %v1273 = vcvt.s32.f32 %v1257
        %v1274 = vcvt.s32.f32 %v1258
        %v1275 = vcvt.s32.f32 %v1259
        %v1276 = vcvt.s32.f32 %v1260
        %v1277 = vcvt.s32.f32 %v1261
        %v1278 = vcvt.s32.f32 %v1262
        %v1279 = vcvt.s32.f32 %v1263
        %v1280 = vcvt.s32.f32 %v1264
        %v1281 = vcvt.s32.f32 %v1265
        %v1282 = vcvt.s32.f32 %v1266
        %v1283 = vcvt.s32.f32 %v1267
        %v1284 = vcvt.s32.f32 %v1268
        %v1285 = vcvt.s32.f32 %v1269
        %v1286 = vcvt.s32.f32 %v1270
        %v1287 = vpack.c.bf16 %v1272, %v1271
        %v1288 = vpack.c.bf16 %v1274, %v1273
        %v1289 = vpack.c.bf16 %v1276, %v1275
        %v1290 = vpack.c.bf16 %v1278, %v1277
        %v1291 = vpack.c.bf16 %v1280, %v1279
        %v1292 = vpack.c.bf16 %v1282, %v1281
        %v1293 = vpack.c.bf16 %v1284, %v1283
        %v1294 = vpack.c.bf16 %v1286, %v1285
        %v1295 = vperm.slane %v603, 7
        %vm1296 = vcmp.eq.s32.totalorder %v607, %v1295
        %vm1297 = vcmp.eq.s32.totalorder %v608, %v1295
        %v1298 = vsel %vm1296, 1, 0
        %v1299 = vsel %vm1297, 1, 0
        %v1300 = vcvt.s32.f32 %v1298
        %v1301 = vcvt.s32.f32 %v1299
        %1302 = vmatpush.bf16.msra.mxu0 %v1294
        %1303 = vmatpush.bf16.msra.mxu0 %v1293
        %1304 = vmatpush.bf16.msra.mxu0 %v1292
        %1305 = vmatpush.bf16.msra.mxu0 %v1291
        %1306 = vmatpush.bf16.msra.mxu0 %v1290
        %1307 = vmatpush.bf16.msra.mxu0 %v1289
        %1308 = vmatpush.bf16.msra.mxu0 %v1288
        %1309 = vmatpush.bf16.msra.mxu0 %v1287
        %1310 = vmatmul.bf16.gmra.mxu0 %v691
        %v1311 = vpop.f32.mrf.mxu0
        %v1312 = vadd.f32 0.0, %v1311
        %v1313 = vpop.f32.mrf.mxu0
        %v1314 = vadd.f32 0.0, %v1313
        %1315 = vdwg.mxu0
        %v1316 = vmul.f32 %v1312, %v1300
        %v1317 = vmul.f32 %v1314, %v1301
        %v1318 = vadd.f32 %v1316, %v1317
        %v1319 = vrot.slane %v1318, 4
        %v1320 = vadd.f32 %v1318, %v1319
        %v1321 = vrot.slane %v1320, 2
        %v1322 = vadd.f32 %v1320, %v1321
        %v1323 = vrot.slane %v1322, 1
        %v1324 = vadd.f32 %v1322, %v1323
        %vm1325 = vcmask 1040384
        %v1326 = vsel %vm1325, %v715, %v802
        %vm1327 = vcmask 1041408
        %v1328 = vsel %vm1327, %v1326, %v889
        %vm1329 = vcmask 1042432
        %v1330 = vsel %vm1329, %v1328, %v976
        %vm1331 = vcmask 1043456
        %v1332 = vsel %vm1331, %v1330, %v1063
        %vm1333 = vcmask 1044480
        %v1334 = vsel %vm1333, %v1332, %v1150
        %vm1335 = vcmask 1045504
        %v1336 = vsel %vm1335, %v1334, %v1237
        %vm1337 = vcmask 1046528
        %v1338 = vsel %vm1337, %v1336, %v1324
        %v1339 = vstv %s230
        %v1340 = vmul.f32 %v1339, %v580
        %v1341 = vstv %s231
        %v1342 = vmul.f32 %v1341, %v585
        %v1343 = vadd.f32 %v1340, %v1342
        %v1344 = vstv %s232
        %v1345 = vadd.f32 %v1343, %v1344
        %v1346 = vstv %s233
        %v1347 = vmul.f32 %v1346, %v580
        %v1348 = vstv %s234
        %v1349 = vmul.f32 %v1348, %v585
        %v1350 = vadd.f32 %v1347, %v1349
        %v1351 = vstv %s235
        %v1352 = vadd.f32 %v1350, %v1351
        %v1353 = vrcp.pop %v1352
        %v1354 = vmul.f32 %v1352, %v1353
        %v1355 = vsub.f32 2.0, %v1354
        %v1356 = vmul.f32 %v1353, %v1355
        %v1357 = vmul.f32 %v1345, %v1356
        %v1358 = vstv %s239
        %v1359 = vadd.f32 %v1357, %v1358
        %v1360 = vstv %s236
        %v1361 = vmul.f32 %v1360, %v580
        %v1362 = vmul.f32 %v1360, %v581
        %v1363 = vstv %s237
        %v1364 = vmul.f32 %v1363, %v585
        %v1365 = vmul.f32 %v1363, %v586
        %v1366 = vadd.f32 %v1361, %v1364
        %v1367 = vadd.f32 %v1362, %v1365
        %v1368 = vstv %s238
        %v1369 = vadd.f32 %v1366, %v1368
        %v1370 = vadd.f32 %v1367, %v1368
        %v1371 = vsub.f32 %v1369, %v1370
        %v1372 = vmul.f32 %v1359, %v1371
        %v1373 = vmul.f32 %v1372, 100.0
        %v1374 = vround.ne.pseudo %v1373
        %v1375 = vmul.f32 %v1374, 0.01
        %v1376 = vsub.f32 %v1338, 1.0
        %v1377 = vand.u32 2147483647, %v1376
        %vm1378 = vcmp.lt.f32.partialorder %v1377, 0.5
        %vm1379 = vcmp.gt.f32.partialorder %v250, 0.5
        %vm1380 = vmand %vm1378, %vm1379
        %vm1381 = vmand %vm1380, %vm593
        %v1382 = vsel %vm1381, %v1375, 0.0
        %1383 = vst [vmem:[%s220] sm:$0xff] %v1382
        %v1384 = vsel %vm1381, 1, 0
        %v1385 = vcvt.s32.f32 %v1384
        %s1386 = scalar_lea.vmem %s220, 8 [#allocation9]
        %1387 = vst [vmem:[%s1386] sm:$0xff] %v1385
        %s1388 = sand.u32 %s98, 1
        %s1389 = scalar_lea.sflag [#allocation4], %s1388
        %s1390 = sand.u32 %s98, 1
        %s1391 = smul.addr %s1390, 16
        %s1392 = scalar_lea.vmem [#allocation9], %s1391
        // Predicated region
        $region45: #{tpu_custom_call.1} parent=31 // pred_check
          %p1393 = pneg %p108
        $region46: #{tpu_custom_call.1} parent=31 // pred_check_branch
          %1395 = sbr.rel (%p1393) target = $region48
        $region47: #{tpu_custom_call.1} parent=31 // pred_region
          %1397 = vsyncadd %s1389, 0
          %s1398 = smul.addr %s22, 8
          %s1399 = scalar_lea.hbm %s3, %s1398
          %s1400 = sshll.u32 %s1392, 4
          %s1401 = int_to_ptr.vmem [resolvable:$true] %s1400
          %s1402 = sshll.u32 %s1399, 4
          %s1403 = int_to_ptr.hbm [resolvable:$true] %s1402
          %1408 = dma.vmem_to_hbm [thread:$0]  %s1401, 256, %s1403, %s1389, 128, 256, 8
        $region48: #{tpu_custom_call.1} parent=31 // pred_fallthru
          _
      $region32: #{tpu_custom_call.1} parent=5 // pred_fallthru
        _
      %p1409 = scmp.le.s32.totalorder 2, %s17
      // Predicated region
      $region49: #{tpu_custom_call.1} parent=5 // pred_check
        %p1410 = pneg %p1409
      $region50: #{tpu_custom_call.1} parent=5 // pred_check_branch
        %1412 = sbr.rel (%p1410) target = $region52
      $region51: #{tpu_custom_call.1} parent=5 // pred_region
        %s1413 = ssub.s32 %s17, 2
        // Predicated region
        $region53: #{tpu_custom_call.1} parent=51 // pred_check
          %p1414 = pneg %p114
        $region54: #{tpu_custom_call.1} parent=51 // pred_check_branch
          %1416 = sbr.rel (%p1414) target = $region56
        $region55: #{tpu_custom_call.1} parent=51 // pred_region
          %s1417 = sand.u32 %s99, 1
          %s1418 = scalar_lea.sflag [#allocation4], %s1417
          %s1419 = sand.u32 %s99, 1
          %s1420 = smul.addr %s1419, 16
          %s1421 = scalar_lea.vmem [#allocation9], %s1420
          %1423 = dma.done %s1418, 256
        $region56: #{tpu_custom_call.1} parent=51 // pred_fallthru
          _
      $region52: #{tpu_custom_call.1} parent=5 // pred_fallthru
        _
    $region6: #{tpu_custom_call.1} parent=1 // loop_footer
      %s21 = sadd.s32 1, %s17
    $region7: #{tpu_custom_call.1} parent=1 // loop_footer_branch
      %16 = sbr.rel target = $region3
    $region8: #{tpu_custom_call.1} parent=1 // loop_exit
      _
    %1424 = vsyncpa [#allocation3], 1
    %s1425 = scalar_lea.sflag [#allocation3], 1
    %1426 = vsyncpa %s1425, 1
    %1427 = vsyncpa [#allocation8], 1
    %1428 = vsyncpa [#allocation4], 1
    %s1429 = scalar_lea.sflag [#allocation4], 1
    %1430 = vsyncpa %s1429, 1
    %1431 = vsyncpa [#allocation5], 1
    %s1432 = scalar_lea.sflag [#allocation5], 1
    %1433 = vsyncpa %s1432, 1

</llo_original>
